<compile_context>
chip_gen: v7x
topology: tpu7x:2x2x1
jax: 0.10.0
libtpu: 0.0.40
codegen_flags: <defaults>
</compile_context>

<pallas_src>
import functools

import jax
import jax.numpy as jnp
from jax.experimental import pallas as pl
from jax.experimental.pallas import tpu as pltpu


def _layernorm(x, gamma, beta, eps=1e-5):
    mu = jnp.mean(x, axis=-1, keepdims=True)
    var = jnp.mean((x - mu) ** 2, axis=-1, keepdims=True)
    return (x - mu) * jax.lax.rsqrt(var + eps) * gamma + beta


def transformer_block_kernel(
    x_ref,
    wqkv_ref, wu_ref, bu_ref,
    g1_ref, b1_ref,
    wf1_ref, bf1_ref, wf2_ref, bf2_ref,
    g2_ref, b2_ref,
    mask_ref,
    o_ref,
    *, heads, hidden, b_tile,
):
    bt, n, emb = x_ref.shape
    m = bt * n
    hh = heads * hidden

    x = x_ref[...]                                   # (bt, n, emb) f32
    x2d = x.reshape(m, emb)                          # merge leading dims (lane dim unchanged)
    x_bf = x2d.astype(jnp.bfloat16)

    # ---- fused Q|K|V projection: one lane-dense MXU matmul (Wq pre-scaled by 1/hidden) ----
    qkv = jnp.dot(x_bf, wqkv_ref[...], preferred_element_type=jnp.float32)   # (m, 3*hh) f32
    qkv_bf = qkv.astype(jnp.bfloat16)

    # ---- split heads: (m, 3*hh) -> (bt*heads, n, hidden); leading batch dim for the MXU ----
    def split_heads(col0):
        parts = []
        for b in range(b_tile):
            rows = qkv_bf[b * n:(b + 1) * n]                         # (n, 3*hh) sublane slice
            for h in range(heads):
                c = col0 + h * hidden
                parts.append(rows[:, c:c + hidden][None])            # (1, n, hidden)
        return jnp.concatenate(parts, axis=0)                        # (bt*heads, n, hidden)

    q = split_heads(0)
    k = split_heads(hh)
    v = split_heads(2 * hh)

    # ---- attention scores, leading-batch dot_general, f32 accumulation ----
    s = jnp.einsum("bqd,bkd->bqk", q, k,
                   preferred_element_type=jnp.float32)               # (bt*heads, n, n)
    s = s + mask_ref[...][None]                                      # causal additive bias

    # ---- softmax over keys (f32); divide via EUP approx reciprocal ----
    s = s - jnp.max(s, axis=-1, keepdims=True)
    p = jnp.exp(s)
    p = p * pl.reciprocal(jnp.sum(p, axis=-1, keepdims=True), approx=True)

    # ---- weighted values ----
    att = jnp.einsum("bqk,bkd->bqd", p.astype(jnp.bfloat16), v,
                     preferred_element_type=jnp.float32)             # (bt*heads, n, hidden)
    att_bf = att.astype(jnp.bfloat16)

    # ---- re-pack heads onto lanes: (bt*heads, n, hidden) -> (m, heads*hidden) ----
    rows = []
    for b in range(b_tile):
        rows.append(jnp.concatenate([att_bf[b * heads + h] for h in range(heads)], axis=-1))
    att2d = jnp.concatenate(rows, axis=0)                            # (m, hh) bf16

    # ---- unify heads: single contraction with K = heads*hidden ----
    attended = jnp.dot(att2d, wu_ref[...],
                       preferred_element_type=jnp.float32) + bu_ref[...]     # (m, emb)

    # ---- residual + LayerNorm 1 (f32) ----
    x1 = _layernorm(attended + x2d, g1_ref[...], b1_ref[...])

    # ---- feed-forward: Linear -> LeakyReLU(0.01) -> Linear ----
    h1 = jnp.dot(x1.astype(jnp.bfloat16), wf1_ref[...],
                 preferred_element_type=jnp.float32) + bf1_ref[...]
    h1 = jnp.where(h1 >= 0, h1, 0.01 * h1)
    ff = jnp.dot(h1.astype(jnp.bfloat16), wf2_ref[...],
                 preferred_element_type=jnp.float32) + bf2_ref[...]

    # ---- residual + LayerNorm 2 ----
    x2 = _layernorm(ff + x1, g2_ref[...], b2_ref[...])
    o_ref[...] = x2.reshape(bt, n, emb).astype(o_ref.dtype)


def transformer_block(x, params, *, heads, hidden):
    """params (module layout): (wq, wk, wv, wu, bu, g1, b1, wf1, bf1, wf2, bf2, g2, b2),
    linear weights stored as (in_features, out_features)."""
    (wq, wk, wv, wu, bu, g1, b1, wf1, bf1, wf2, bf2, g2, b2) = params
    bs, n, emb = x.shape

    # Host-side (free) preprocessing:
    #   * fold the combined 1/hidden score scale into Wq,
    #   * fuse Wq|Wk|Wv into one matrix,
    #   * cast matmul weights to bf16 (halves weight DMA / VMEM; MXU takes bf16 natively).
    wqkv = jnp.concatenate([wq * (1.0 / hidden), wk, wv], axis=1).astype(jnp.bfloat16)
    wu_b = wu.astype(jnp.bfloat16)
    wf1_b = wf1.astype(jnp.bfloat16)
    wf2_b = wf2.astype(jnp.bfloat16)

    # Causal additive bias (att_type='all'): 0 where q_t >= kv_t, else -1e30. Precomputed once.
    idx = jnp.arange(n)
    mask_bias = jnp.where(idx[:, None] >= idx[None, :], 0.0, -1e30).astype(jnp.float32)

    # Batch tile: largest divisor of bs that is <= 8 (amortizes per-grid-step overhead, raises M).
    b_tile = 1
    for cand in range(1, min(bs, 8) + 1):
        if bs % cand == 0:
            b_tile = cand

    kparams = (wqkv, wu_b, bu, g1, b1, wf1_b, bf1, wf2_b, bf2, g2, b2, mask_bias)

    kernel = functools.partial(transformer_block_kernel,
                               heads=heads, hidden=hidden, b_tile=b_tile)

    def const_spec(shape):
        nd = len(shape)
        return pl.BlockSpec(shape, lambda b: (0,) * nd)

    in_specs = [pl.BlockSpec((b_tile, n, emb), lambda b: (b, 0, 0))]
    in_specs += [const_spec(p.shape) for p in kparams]

    return pl.pallas_call(
        kernel,
        out_shape=jax.ShapeDtypeStruct((bs, n, emb), jnp.float32),
        grid=(bs // b_tile,),
        in_specs=in_specs,
        out_specs=pl.BlockSpec((b_tile, n, emb), lambda b: (b, 0, 0)),
        compiler_params=pltpu.CompilerParams(
            dimension_semantics=("parallel",),
            # Above the 16 MiB (v5e) / 32 MiB (v6e, v7x) scoped defaults, below v7x's 64 MiB physical.
            vmem_limit_bytes=48 * 1024 * 1024,
        ),
    )(x, *kparams)


# ---------------- pure-JAX f32 reference (module semantics) for verification ----------------
def transformer_block_ref(x, params, *, heads, hidden):
    (wq, wk, wv, wu, bu, g1, b1, wf1, bf1, wf2, bf2, g2, b2) = params
    bs, n, emb = x.shape
    scale = 1.0 / jnp.sqrt(jnp.float32(hidden))
    q = (x @ wq).reshape(bs, n, heads, hidden) * scale
    k = (x @ wk).reshape(bs, n, heads, hidden) * scale
    v = (x @ wv).reshape(bs, n, heads, hidden)
    dot = jnp.einsum("bqhd,bkhd->bhqk", q, k)
    causal = jnp.arange(n)[:, None] >= jnp.arange(n)[None, :]
    dot = jnp.where(causal[None, None], dot, -jnp.inf)
    p = jax.nn.softmax(dot, axis=-1)
    out = jnp.einsum("bhqk,bkhd->bqhd", p, v).reshape(bs, n, heads * hidden)
    attended = out @ wu + bu
    x1 = _layernorm(attended + x, g1, b1)
    h1 = x1 @ wf1 + bf1
    h1 = jnp.where(h1 >= 0, h1, 0.01 * h1)
    ff = h1 @ wf2 + bf2
    return _layernorm(ff + x1, g2, b2)


if __name__ == "__main__":
    bs, n, emb = 2, 16, 64
    heads, hidden = 4, 16
    ff_hidden_mult = 4
    ff_hidden = ff_hidden_mult * emb

    key = jax.random.PRNGKey(0)
    ks = jax.random.split(key, 9)

    x = jax.random.normal(ks[0], (bs, n, emb), jnp.float32)

    s = 0.05
    wq = jax.random.normal(ks[1], (emb, heads * hidden), jnp.float32) * s
    wk = jax.random.normal(ks[2], (emb, heads * hidden), jnp.float32) * s
    wv = jax.random.normal(ks[3], (emb, heads * hidden), jnp.float32) * s
    wu = jax.random.normal(ks[4], (heads * hidden, emb), jnp.float32) * s
    bu = jax.random.normal(ks[5], (1, emb), jnp.float32) * s
    g1 = jnp.ones((1, emb), jnp.float32)
    b1 = jnp.zeros((1, emb), jnp.float32)
    wf1 = jax.random.normal(ks[6], (emb, ff_hidden), jnp.float32) * s
    bf1 = jax.random.normal(ks[7], (1, ff_hidden), jnp.float32) * s
    wf2 = jax.random.normal(ks[8], (ff_hidden, emb), jnp.float32) * s
    bf2 = jnp.zeros((1, emb), jnp.float32)
    g2 = jnp.ones((1, emb), jnp.float32)
    b2 = jnp.zeros((1, emb), jnp.float32)

    params = (wq, wk, wv, wu, bu, g1, b1, wf1, bf1, wf2, bf2, g2, b2)

    out = jax.block_until_ready(transformer_block(x, params, heads=heads, hidden=hidden))
    ref = jax.block_until_ready(transformer_block_ref(x, params, heads=heads, hidden=hidden))

    assert out.shape == (bs, n, emb)
    max_err = float(jnp.max(jnp.abs(out - ref)))
    # bf16 matmul inputs + approx reciprocal vs. pure-f32 reference => loose tolerance
    assert jnp.allclose(out, ref, atol=2e-2, rtol=2e-2), max_err

    print("KERNEL_OK")
</pallas_src>

<mosaic_0001>
module attributes {stable_mosaic.version = 11 : i64} {
  func.func @transformer_block_kernel(%arg0: i32, %arg1: memref<2x16x64xf32, #tpu.memory_space<vmem>>, %arg2: memref<64x192xbf16, #tpu.memory_space<vmem>>, %arg3: memref<64x64xbf16, #tpu.memory_space<vmem>>, %arg4: memref<1x64xf32, #tpu.memory_space<vmem>>, %arg5: memref<1x64xf32, #tpu.memory_space<vmem>>, %arg6: memref<1x64xf32, #tpu.memory_space<vmem>>, %arg7: memref<64x256xbf16, #tpu.memory_space<vmem>>, %arg8: memref<1x256xf32, #tpu.memory_space<vmem>>, %arg9: memref<256x64xbf16, #tpu.memory_space<vmem>>, %arg10: memref<1x64xf32, #tpu.memory_space<vmem>>, %arg11: memref<1x64xf32, #tpu.memory_space<vmem>>, %arg12: memref<1x64xf32, #tpu.memory_space<vmem>>, %arg13: memref<16x16xf32, #tpu.memory_space<vmem>>, %arg14: memref<2x16x64xf32, #tpu.memory_space<vmem>>) attributes {dimension_semantics = [#tpu.dimension_semantics<parallel>], iteration_bounds = array<i64: 1>, scalar_prefetch = 0 : i64, scratch_operands = 0 : i64, tpu.core_type = #tpu.core_type<tc>, window_params = [{transform_indices = @transform_0, window_bounds = array<i64: 2, 16, 64>}, {pipeline_mode = #tpu.pipeline_mode<synchronous>, transform_indices = @transform_1, window_bounds = array<i64: 64, 192>}, {pipeline_mode = #tpu.pipeline_mode<synchronous>, transform_indices = @transform_2, window_bounds = array<i64: 64, 64>}, {pipeline_mode = #tpu.pipeline_mode<synchronous>, transform_indices = @transform_3, window_bounds = array<i64: 1, 64>}, {pipeline_mode = #tpu.pipeline_mode<synchronous>, transform_indices = @transform_4, window_bounds = array<i64: 1, 64>}, {pipeline_mode = #tpu.pipeline_mode<synchronous>, transform_indices = @transform_5, window_bounds = array<i64: 1, 64>}, {pipeline_mode = #tpu.pipeline_mode<synchronous>, transform_indices = @transform_6, window_bounds = array<i64: 64, 256>}, {pipeline_mode = #tpu.pipeline_mode<synchronous>, transform_indices = @transform_7, window_bounds = array<i64: 1, 256>}, {pipeline_mode = #tpu.pipeline_mode<synchronous>, transform_indices = @transform_8, window_bounds = array<i64: 256, 64>}, {pipeline_mode = #tpu.pipeline_mode<synchronous>, transform_indices = @transform_9, window_bounds = array<i64: 1, 64>}, {pipeline_mode = #tpu.pipeline_mode<synchronous>, transform_indices = @transform_10, window_bounds = array<i64: 1, 64>}, {pipeline_mode = #tpu.pipeline_mode<synchronous>, transform_indices = @transform_11, window_bounds = array<i64: 1, 64>}, {pipeline_mode = #tpu.pipeline_mode<synchronous>, transform_indices = @transform_12, window_bounds = array<i64: 16, 16>}, {transform_indices = @transform_13, window_bounds = array<i64: 2, 16, 64>}]} {
    %c0 = arith.constant 0 : index
    %c0_0 = arith.constant 0 : index
    %c0_1 = arith.constant 0 : index
    %0 = vector.load %arg1[%c0, %c0_0, %c0_1] : memref<2x16x64xf32, #tpu.memory_space<vmem>>, vector<2x16x64xf32>
    %1 = vector.shape_cast %0 : vector<2x16x64xf32> to vector<32x64xf32>
    %2 = arith.truncf %1 : vector<32x64xf32> to vector<32x64xbf16>
    %c0_2 = arith.constant 0 : index
    %c0_3 = arith.constant 0 : index
    %3 = vector.load %arg2[%c0_2, %c0_3] : memref<64x192xbf16, #tpu.memory_space<vmem>>, vector<64x192xbf16>
    %cst = arith.constant dense<0.000000e+00> : vector<32x192xf32>
    %4 = tpu.matmul %2, %3, %cst {dimension_numbers = #tpu.dot_dimension_numbers<[1], [0], [0], [1], [0, 0, 1, 1], [], []>} : vector<32x64xbf16>, vector<64x192xbf16>, vector<32x192xf32> -> vector<32x192xf32>
    %5 = arith.truncf %4 : vector<32x192xf32> to vector<32x192xbf16>
    %6 = vector.extract_strided_slice %5 {offsets = [0, 0], sizes = [16, 192], strides = [1, 1]} : vector<32x192xbf16> to vector<16x192xbf16>
    %7 = vector.extract_strided_slice %6 {offsets = [0, 0], sizes = [16, 16], strides = [1, 1]} : vector<16x192xbf16> to vector<16x16xbf16>
    %8 = vector.shape_cast %7 : vector<16x16xbf16> to vector<1x16x16xbf16>
    %9 = vector.extract_strided_slice %6 {offsets = [0, 16], sizes = [16, 16], strides = [1, 1]} : vector<16x192xbf16> to vector<16x16xbf16>
    %10 = vector.shape_cast %9 : vector<16x16xbf16> to vector<1x16x16xbf16>
    %11 = vector.extract_strided_slice %6 {offsets = [0, 32], sizes = [16, 16], strides = [1, 1]} : vector<16x192xbf16> to vector<16x16xbf16>
    %12 = vector.shape_cast %11 : vector<16x16xbf16> to vector<1x16x16xbf16>
    %13 = vector.extract_strided_slice %6 {offsets = [0, 48], sizes = [16, 16], strides = [1, 1]} : vector<16x192xbf16> to vector<16x16xbf16>
    %14 = vector.shape_cast %13 : vector<16x16xbf16> to vector<1x16x16xbf16>
    %15 = vector.extract_strided_slice %5 {offsets = [16, 0], sizes = [16, 192], strides = [1, 1]} : vector<32x192xbf16> to vector<16x192xbf16>
    %16 = vector.extract_strided_slice %15 {offsets = [0, 0], sizes = [16, 16], strides = [1, 1]} : vector<16x192xbf16> to vector<16x16xbf16>
    %17 = vector.shape_cast %16 : vector<16x16xbf16> to vector<1x16x16xbf16>
    %18 = vector.extract_strided_slice %15 {offsets = [0, 16], sizes = [16, 16], strides = [1, 1]} : vector<16x192xbf16> to vector<16x16xbf16>
    %19 = vector.shape_cast %18 : vector<16x16xbf16> to vector<1x16x16xbf16>
    %20 = vector.extract_strided_slice %15 {offsets = [0, 32], sizes = [16, 16], strides = [1, 1]} : vector<16x192xbf16> to vector<16x16xbf16>
    %21 = vector.shape_cast %20 : vector<16x16xbf16> to vector<1x16x16xbf16>
    %22 = vector.extract_strided_slice %15 {offsets = [0, 48], sizes = [16, 16], strides = [1, 1]} : vector<16x192xbf16> to vector<16x16xbf16>
    %23 = vector.shape_cast %22 : vector<16x16xbf16> to vector<1x16x16xbf16>
    %24 = tpu.concatenate %8, %10, %12, %14, %17, %19, %21, %23 in 0 : vector<1x16x16xbf16>, vector<1x16x16xbf16>, vector<1x16x16xbf16>, vector<1x16x16xbf16>, vector<1x16x16xbf16>, vector<1x16x16xbf16>, vector<1x16x16xbf16>, vector<1x16x16xbf16> -> vector<8x16x16xbf16>
    %25 = vector.extract_strided_slice %5 {offsets = [0, 0], sizes = [16, 192], strides = [1, 1]} : vector<32x192xbf16> to vector<16x192xbf16>
    %26 = vector.extract_strided_slice %25 {offsets = [0, 64], sizes = [16, 16], strides = [1, 1]} : vector<16x192xbf16> to vector<16x16xbf16>
    %27 = vector.shape_cast %26 : vector<16x16xbf16> to vector<1x16x16xbf16>
    %28 = vector.extract_strided_slice %25 {offsets = [0, 80], sizes = [16, 16], strides = [1, 1]} : vector<16x192xbf16> to vector<16x16xbf16>
    %29 = vector.shape_cast %28 : vector<16x16xbf16> to vector<1x16x16xbf16>
    %30 = vector.extract_strided_slice %25 {offsets = [0, 96], sizes = [16, 16], strides = [1, 1]} : vector<16x192xbf16> to vector<16x16xbf16>
    %31 = vector.shape_cast %30 : vector<16x16xbf16> to vector<1x16x16xbf16>
    %32 = vector.extract_strided_slice %25 {offsets = [0, 112], sizes = [16, 16], strides = [1, 1]} : vector<16x192xbf16> to vector<16x16xbf16>
    %33 = vector.shape_cast %32 : vector<16x16xbf16> to vector<1x16x16xbf16>
    %34 = vector.extract_strided_slice %5 {offsets = [16, 0], sizes = [16, 192], strides = [1, 1]} : vector<32x192xbf16> to vector<16x192xbf16>
    %35 = vector.extract_strided_slice %34 {offsets = [0, 64], sizes = [16, 16], strides = [1, 1]} : vector<16x192xbf16> to vector<16x16xbf16>
    %36 = vector.shape_cast %35 : vector<16x16xbf16> to vector<1x16x16xbf16>
    %37 = vector.extract_strided_slice %34 {offsets = [0, 80], sizes = [16, 16], strides = [1, 1]} : vector<16x192xbf16> to vector<16x16xbf16>
    %38 = vector.shape_cast %37 : vector<16x16xbf16> to vector<1x16x16xbf16>
    %39 = vector.extract_strided_slice %34 {offsets = [0, 96], sizes = [16, 16], strides = [1, 1]} : vector<16x192xbf16> to vector<16x16xbf16>
    %40 = vector.shape_cast %39 : vector<16x16xbf16> to vector<1x16x16xbf16>
    %41 = vector.extract_strided_slice %34 {offsets = [0, 112], sizes = [16, 16], strides = [1, 1]} : vector<16x192xbf16> to vector<16x16xbf16>
    %42 = vector.shape_cast %41 : vector<16x16xbf16> to vector<1x16x16xbf16>
    %43 = tpu.concatenate %27, %29, %31, %33, %36, %38, %40, %42 in 0 : vector<1x16x16xbf16>, vector<1x16x16xbf16>, vector<1x16x16xbf16>, vector<1x16x16xbf16>, vector<1x16x16xbf16>, vector<1x16x16xbf16>, vector<1x16x16xbf16>, vector<1x16x16xbf16> -> vector<8x16x16xbf16>
    %44 = vector.extract_strided_slice %5 {offsets = [0, 0], sizes = [16, 192], strides = [1, 1]} : vector<32x192xbf16> to vector<16x192xbf16>
    %45 = vector.extract_strided_slice %44 {offsets = [0, 128], sizes = [16, 16], strides = [1, 1]} : vector<16x192xbf16> to vector<16x16xbf16>
    %46 = vector.shape_cast %45 : vector<16x16xbf16> to vector<1x16x16xbf16>
    %47 = vector.extract_strided_slice %44 {offsets = [0, 144], sizes = [16, 16], strides = [1, 1]} : vector<16x192xbf16> to vector<16x16xbf16>
    %48 = vector.shape_cast %47 : vector<16x16xbf16> to vector<1x16x16xbf16>
    %49 = vector.extract_strided_slice %44 {offsets = [0, 160], sizes = [16, 16], strides = [1, 1]} : vector<16x192xbf16> to vector<16x16xbf16>
    %50 = vector.shape_cast %49 : vector<16x16xbf16> to vector<1x16x16xbf16>
    %51 = vector.extract_strided_slice %44 {offsets = [0, 176], sizes = [16, 16], strides = [1, 1]} : vector<16x192xbf16> to vector<16x16xbf16>
    %52 = vector.shape_cast %51 : vector<16x16xbf16> to vector<1x16x16xbf16>
    %53 = vector.extract_strided_slice %5 {offsets = [16, 0], sizes = [16, 192], strides = [1, 1]} : vector<32x192xbf16> to vector<16x192xbf16>
    %54 = vector.extract_strided_slice %53 {offsets = [0, 128], sizes = [16, 16], strides = [1, 1]} : vector<16x192xbf16> to vector<16x16xbf16>
    %55 = vector.shape_cast %54 : vector<16x16xbf16> to vector<1x16x16xbf16>
    %56 = vector.extract_strided_slice %53 {offsets = [0, 144], sizes = [16, 16], strides = [1, 1]} : vector<16x192xbf16> to vector<16x16xbf16>
    %57 = vector.shape_cast %56 : vector<16x16xbf16> to vector<1x16x16xbf16>
    %58 = vector.extract_strided_slice %53 {offsets = [0, 160], sizes = [16, 16], strides = [1, 1]} : vector<16x192xbf16> to vector<16x16xbf16>
    %59 = vector.shape_cast %58 : vector<16x16xbf16> to vector<1x16x16xbf16>
    %60 = vector.extract_strided_slice %53 {offsets = [0, 176], sizes = [16, 16], strides = [1, 1]} : vector<16x192xbf16> to vector<16x16xbf16>
    %61 = vector.shape_cast %60 : vector<16x16xbf16> to vector<1x16x16xbf16>
    %62 = tpu.concatenate %46, %48, %50, %52, %55, %57, %59, %61 in 0 : vector<1x16x16xbf16>, vector<1x16x16xbf16>, vector<1x16x16xbf16>, vector<1x16x16xbf16>, vector<1x16x16xbf16>, vector<1x16x16xbf16>, vector<1x16x16xbf16>, vector<1x16x16xbf16> -> vector<8x16x16xbf16>
    "tpu.trace_start"() <{level = 10 : i32, message = "bqd,bkd->bqk"}> : () -> ()
    %cst_4 = arith.constant dense<0.000000e+00> : vector<8x16x16xf32>
    %63 = tpu.matmul %24, %43, %cst_4 {dimension_numbers = #tpu.dot_dimension_numbers<[2], [2], [1], [1], [0, 0, 0, 1, 1, 1], [0], [0]>} : vector<8x16x16xbf16>, vector<8x16x16xbf16>, vector<8x16x16xf32> -> vector<8x16x16xf32>
    "tpu.trace_stop"() : () -> ()
    %c0_5 = arith.constant 0 : index
    %c0_6 = arith.constant 0 : index
    %64 = vector.load %arg13[%c0_5, %c0_6] : memref<16x16xf32, #tpu.memory_space<vmem>>, vector<16x16xf32>
    %65 = vector.shape_cast %64 : vector<16x16xf32> to vector<1x16x16xf32>
    %66 = vector.broadcast %65 : vector<1x16x16xf32> to vector<8x16x16xf32>
    %67 = arith.addf %63, %66 : vector<8x16x16xf32>
    %cst_7 = arith.constant dense<0xFF800000> : vector<8x16xf32>
    %68 = vector.multi_reduction <maximumf>, %67, %cst_7 [2] : vector<8x16x16xf32> to vector<8x16xf32>
    %69 = vector.shape_cast %68 : vector<8x16xf32> to vector<8x16x1xf32>
    %70 = vector.broadcast %69 : vector<8x16x1xf32> to vector<8x16x16xf32>
    %71 = arith.subf %67, %70 : vector<8x16x16xf32>
    %72 = math.exp %71 : vector<8x16x16xf32>
    %cst_8 = arith.constant dense<0.000000e+00> : vector<8x16xf32>
    %73 = vector.multi_reduction <add>, %72, %cst_8 [2] : vector<8x16x16xf32> to vector<8x16xf32>
    %74 = vector.shape_cast %73 : vector<8x16xf32> to vector<8x16x1xf32>
    %75 = tpu.reciprocal %74 {approx = true} : vector<8x16x1xf32> -> vector<8x16x1xf32>
    %76 = vector.broadcast %75 : vector<8x16x1xf32> to vector<8x16x16xf32>
    %77 = arith.mulf %72, %76 : vector<8x16x16xf32>
    %78 = arith.truncf %77 : vector<8x16x16xf32> to vector<8x16x16xbf16>
    "tpu.trace_start"() <{level = 10 : i32, message = "bqk,bkd->bqd"}> : () -> ()
    %cst_9 = arith.constant dense<0.000000e+00> : vector<8x16x16xf32>
    %79 = tpu.matmul %78, %62, %cst_9 {dimension_numbers = #tpu.dot_dimension_numbers<[2], [1], [1], [2], [0, 0, 0, 1, 1, 2], [0], [0]>} : vector<8x16x16xbf16>, vector<8x16x16xbf16>, vector<8x16x16xf32> -> vector<8x16x16xf32>
    "tpu.trace_stop"() : () -> ()
    %80 = arith.truncf %79 : vector<8x16x16xf32> to vector<8x16x16xbf16>
    %81 = vector.extract_strided_slice %80 {offsets = [0, 0, 0], sizes = [1, 16, 16], strides = [1, 1, 1]} : vector<8x16x16xbf16> to vector<1x16x16xbf16>
    %82 = vector.shape_cast %81 : vector<1x16x16xbf16> to vector<16x16xbf16>
    %83 = vector.extract_strided_slice %80 {offsets = [1, 0, 0], sizes = [1, 16, 16], strides = [1, 1, 1]} : vector<8x16x16xbf16> to vector<1x16x16xbf16>
    %84 = vector.shape_cast %83 : vector<1x16x16xbf16> to vector<16x16xbf16>
    %85 = vector.extract_strided_slice %80 {offsets = [2, 0, 0], sizes = [1, 16, 16], strides = [1, 1, 1]} : vector<8x16x16xbf16> to vector<1x16x16xbf16>
    %86 = vector.shape_cast %85 : vector<1x16x16xbf16> to vector<16x16xbf16>
    %87 = vector.extract_strided_slice %80 {offsets = [3, 0, 0], sizes = [1, 16, 16], strides = [1, 1, 1]} : vector<8x16x16xbf16> to vector<1x16x16xbf16>
    %88 = vector.shape_cast %87 : vector<1x16x16xbf16> to vector<16x16xbf16>
    %89 = tpu.concatenate %82, %84, %86, %88 in 1 : vector<16x16xbf16>, vector<16x16xbf16>, vector<16x16xbf16>, vector<16x16xbf16> -> vector<16x64xbf16>
    %90 = vector.extract_strided_slice %80 {offsets = [4, 0, 0], sizes = [1, 16, 16], strides = [1, 1, 1]} : vector<8x16x16xbf16> to vector<1x16x16xbf16>
    %91 = vector.shape_cast %90 : vector<1x16x16xbf16> to vector<16x16xbf16>
    %92 = vector.extract_strided_slice %80 {offsets = [5, 0, 0], sizes = [1, 16, 16], strides = [1, 1, 1]} : vector<8x16x16xbf16> to vector<1x16x16xbf16>
    %93 = vector.shape_cast %92 : vector<1x16x16xbf16> to vector<16x16xbf16>
    %94 = vector.extract_strided_slice %80 {offsets = [6, 0, 0], sizes = [1, 16, 16], strides = [1, 1, 1]} : vector<8x16x16xbf16> to vector<1x16x16xbf16>
    %95 = vector.shape_cast %94 : vector<1x16x16xbf16> to vector<16x16xbf16>
    %96 = vector.extract_strided_slice %80 {offsets = [7, 0, 0], sizes = [1, 16, 16], strides = [1, 1, 1]} : vector<8x16x16xbf16> to vector<1x16x16xbf16>
    %97 = vector.shape_cast %96 : vector<1x16x16xbf16> to vector<16x16xbf16>
    %98 = tpu.concatenate %91, %93, %95, %97 in 1 : vector<16x16xbf16>, vector<16x16xbf16>, vector<16x16xbf16>, vector<16x16xbf16> -> vector<16x64xbf16>
    %99 = tpu.concatenate %89, %98 in 0 : vector<16x64xbf16>, vector<16x64xbf16> -> vector<32x64xbf16>
    %c0_10 = arith.constant 0 : index
    %c0_11 = arith.constant 0 : index
    %100 = vector.load %arg3[%c0_10, %c0_11] : memref<64x64xbf16, #tpu.memory_space<vmem>>, vector<64x64xbf16>
    %cst_12 = arith.constant dense<0.000000e+00> : vector<32x64xf32>
    %101 = tpu.matmul %99, %100, %cst_12 {dimension_numbers = #tpu.dot_dimension_numbers<[1], [0], [0], [1], [0, 0, 1, 1], [], []>} : vector<32x64xbf16>, vector<64x64xbf16>, vector<32x64xf32> -> vector<32x64xf32>
    %c0_13 = arith.constant 0 : index
    %c0_14 = arith.constant 0 : index
    %102 = vector.load %arg4[%c0_13, %c0_14] : memref<1x64xf32, #tpu.memory_space<vmem>>, vector<1x64xf32>
    %103 = vector.broadcast %102 : vector<1x64xf32> to vector<32x64xf32>
    %104 = arith.addf %101, %103 : vector<32x64xf32>
    %105 = arith.addf %104, %1 : vector<32x64xf32>
    %c0_15 = arith.constant 0 : index
    %c0_16 = arith.constant 0 : index
    %106 = vector.load %arg5[%c0_15, %c0_16] : memref<1x64xf32, #tpu.memory_space<vmem>>, vector<1x64xf32>
    %c0_17 = arith.constant 0 : index
    %c0_18 = arith.constant 0 : index
    %107 = vector.load %arg6[%c0_17, %c0_18] : memref<1x64xf32, #tpu.memory_space<vmem>>, vector<1x64xf32>
    %cst_19 = arith.constant dense<0.000000e+00> : vector<32xf32>
    %108 = vector.multi_reduction <add>, %105, %cst_19 [1] : vector<32x64xf32> to vector<32xf32>
    %109 = vector.shape_cast %108 : vector<32xf32> to vector<32x1xf32>
    %cst_20 = arith.constant 6.400000e+01 : f32
    %110 = vector.broadcast %cst_20 : f32 to vector<32x1xf32>
    %111 = arith.divf %109, %110 : vector<32x1xf32>
    %112 = vector.broadcast %111 : vector<32x1xf32> to vector<32x64xf32>
    %113 = arith.subf %105, %112 : vector<32x64xf32>
    %114 = arith.mulf %113, %113 : vector<32x64xf32>
    %cst_21 = arith.constant dense<0.000000e+00> : vector<32xf32>
    %115 = vector.multi_reduction <add>, %114, %cst_21 [1] : vector<32x64xf32> to vector<32xf32>
    %116 = vector.shape_cast %115 : vector<32xf32> to vector<32x1xf32>
    %cst_22 = arith.constant 6.400000e+01 : f32
    %117 = vector.broadcast %cst_22 : f32 to vector<32x1xf32>
    %118 = arith.divf %116, %117 : vector<32x1xf32>
    %119 = vector.broadcast %111 : vector<32x1xf32> to vector<32x64xf32>
    %120 = arith.subf %105, %119 : vector<32x64xf32>
    %cst_23 = arith.constant 9.99999974E-6 : f32
    %121 = vector.broadcast %cst_23 : f32 to vector<32x1xf32>
    %122 = arith.addf %118, %121 : vector<32x1xf32>
    %123 = math.rsqrt %122 : vector<32x1xf32>
    %124 = vector.broadcast %123 : vector<32x1xf32> to vector<32x64xf32>
    %125 = arith.mulf %120, %124 : vector<32x64xf32>
    %126 = vector.broadcast %106 : vector<1x64xf32> to vector<32x64xf32>
    %127 = arith.mulf %125, %126 : vector<32x64xf32>
    %128 = vector.broadcast %107 : vector<1x64xf32> to vector<32x64xf32>
    %129 = arith.addf %127, %128 : vector<32x64xf32>
    %130 = arith.truncf %129 : vector<32x64xf32> to vector<32x64xbf16>
    %c0_24 = arith.constant 0 : index
    %c0_25 = arith.constant 0 : index
    %131 = vector.load %arg7[%c0_24, %c0_25] : memref<64x256xbf16, #tpu.memory_space<vmem>>, vector<64x256xbf16>
    %cst_26 = arith.constant dense<0.000000e+00> : vector<32x256xf32>
    %132 = tpu.matmul %130, %131, %cst_26 {dimension_numbers = #tpu.dot_dimension_numbers<[1], [0], [0], [1], [0, 0, 1, 1], [], []>} : vector<32x64xbf16>, vector<64x256xbf16>, vector<32x256xf32> -> vector<32x256xf32>
    %c0_27 = arith.constant 0 : index
    %c0_28 = arith.constant 0 : index
    %133 = vector.load %arg8[%c0_27, %c0_28] : memref<1x256xf32, #tpu.memory_space<vmem>>, vector<1x256xf32>
    %134 = vector.broadcast %133 : vector<1x256xf32> to vector<32x256xf32>
    %135 = arith.addf %132, %134 : vector<32x256xf32>
    %cst_29 = arith.constant 0.000000e+00 : f32
    %136 = vector.broadcast %cst_29 : f32 to vector<32x256xf32>
    %137 = arith.cmpf oge, %135, %136 : vector<32x256xf32>
    %cst_30 = arith.constant 0.00999999977 : f32
    %138 = vector.broadcast %cst_30 : f32 to vector<32x256xf32>
    %139 = arith.mulf %138, %135 : vector<32x256xf32>
    %140 = arith.select %137, %135, %139 : vector<32x256xi1>, vector<32x256xf32>
    %141 = arith.truncf %140 : vector<32x256xf32> to vector<32x256xbf16>
    %c0_31 = arith.constant 0 : index
    %c0_32 = arith.constant 0 : index
    %142 = vector.load %arg9[%c0_31, %c0_32] : memref<256x64xbf16, #tpu.memory_space<vmem>>, vector<256x64xbf16>
    %cst_33 = arith.constant dense<0.000000e+00> : vector<32x64xf32>
    %143 = tpu.matmul %141, %142, %cst_33 {dimension_numbers = #tpu.dot_dimension_numbers<[1], [0], [0], [1], [0, 0, 1, 1], [], []>} : vector<32x256xbf16>, vector<256x64xbf16>, vector<32x64xf32> -> vector<32x64xf32>
    %c0_34 = arith.constant 0 : index
    %c0_35 = arith.constant 0 : index
    %144 = vector.load %arg10[%c0_34, %c0_35] : memref<1x64xf32, #tpu.memory_space<vmem>>, vector<1x64xf32>
    %145 = vector.broadcast %144 : vector<1x64xf32> to vector<32x64xf32>
    %146 = arith.addf %143, %145 : vector<32x64xf32>
    %147 = arith.addf %146, %129 : vector<32x64xf32>
    %c0_36 = arith.constant 0 : index
    %c0_37 = arith.constant 0 : index
    %148 = vector.load %arg11[%c0_36, %c0_37] : memref<1x64xf32, #tpu.memory_space<vmem>>, vector<1x64xf32>
    %c0_38 = arith.constant 0 : index
    %c0_39 = arith.constant 0 : index
    %149 = vector.load %arg12[%c0_38, %c0_39] : memref<1x64xf32, #tpu.memory_space<vmem>>, vector<1x64xf32>
    %cst_40 = arith.constant dense<0.000000e+00> : vector<32xf32>
    %150 = vector.multi_reduction <add>, %147, %cst_40 [1] : vector<32x64xf32> to vector<32xf32>
    %151 = vector.shape_cast %150 : vector<32xf32> to vector<32x1xf32>
    %cst_41 = arith.constant 6.400000e+01 : f32
    %152 = vector.broadcast %cst_41 : f32 to vector<32x1xf32>
    %153 = arith.divf %151, %152 : vector<32x1xf32>
    %154 = vector.broadcast %153 : vector<32x1xf32> to vector<32x64xf32>
    %155 = arith.subf %147, %154 : vector<32x64xf32>
    %156 = arith.mulf %155, %155 : vector<32x64xf32>
    %cst_42 = arith.constant dense<0.000000e+00> : vector<32xf32>
    %157 = vector.multi_reduction <add>, %156, %cst_42 [1] : vector<32x64xf32> to vector<32xf32>
    %158 = vector.shape_cast %157 : vector<32xf32> to vector<32x1xf32>
    %cst_43 = arith.constant 6.400000e+01 : f32
    %159 = vector.broadcast %cst_43 : f32 to vector<32x1xf32>
    %160 = arith.divf %158, %159 : vector<32x1xf32>
    %161 = vector.broadcast %153 : vector<32x1xf32> to vector<32x64xf32>
    %162 = arith.subf %147, %161 : vector<32x64xf32>
    %cst_44 = arith.constant 9.99999974E-6 : f32
    %163 = vector.broadcast %cst_44 : f32 to vector<32x1xf32>
    %164 = arith.addf %160, %163 : vector<32x1xf32>
    %165 = math.rsqrt %164 : vector<32x1xf32>
    %166 = vector.broadcast %165 : vector<32x1xf32> to vector<32x64xf32>
    %167 = arith.mulf %162, %166 : vector<32x64xf32>
    %168 = vector.broadcast %148 : vector<1x64xf32> to vector<32x64xf32>
    %169 = arith.mulf %167, %168 : vector<32x64xf32>
    %170 = vector.broadcast %149 : vector<1x64xf32> to vector<32x64xf32>
    %171 = arith.addf %169, %170 : vector<32x64xf32>
    %172 = vector.shape_cast %171 : vector<32x64xf32> to vector<2x16x64xf32>
    %c0_45 = arith.constant 0 : index
    %c0_46 = arith.constant 0 : index
    %c0_47 = arith.constant 0 : index
    %173 = vector.load %arg14[%c0_45, %c0_46, %c0_47] : memref<2x16x64xf32, #tpu.memory_space<vmem>>, vector<2x16x64xf32>
    tpu.vector_store %arg14[%c0_45, %c0_46, %c0_47], %172 {strides = array<i32>} : memref<2x16x64xf32, #tpu.memory_space<vmem>>, vector<2x16x64xf32>,
    return
  }
  func.func @transform_0(%arg0: i32) -> (i32, i32, i32) {
    %c0_i32 = arith.constant 0 : i32
    %c0_i32_0 = arith.constant 0 : i32
    %c0_i32_1 = arith.constant 0 : i32
    return %arg0, %c0_i32, %c0_i32_0 : i32, i32, i32
  }
  func.func @transform_1(%arg0: i32) -> (i32, i32) {
    %c0_i32 = arith.constant 0 : i32
    %c0_i32_0 = arith.constant 0 : i32
    %c0_i32_1 = arith.constant 0 : i32
    return %c0_i32, %c0_i32_0 : i32, i32
  }
  func.func @transform_2(%arg0: i32) -> (i32, i32) {
    %c0_i32 = arith.constant 0 : i32
    %c0_i32_0 = arith.constant 0 : i32
    %c0_i32_1 = arith.constant 0 : i32
    return %c0_i32, %c0_i32_0 : i32, i32
  }
  func.func @transform_3(%arg0: i32) -> (i32, i32) {
    %c0_i32 = arith.constant 0 : i32
    %c0_i32_0 = arith.constant 0 : i32
    %c0_i32_1 = arith.constant 0 : i32
    return %c0_i32, %c0_i32_0 : i32, i32
  }
  func.func @transform_4(%arg0: i32) -> (i32, i32) {
    %c0_i32 = arith.constant 0 : i32
    %c0_i32_0 = arith.constant 0 : i32
    %c0_i32_1 = arith.constant 0 : i32
    return %c0_i32, %c0_i32_0 : i32, i32
  }
  func.func @transform_5(%arg0: i32) -> (i32, i32) {
    %c0_i32 = arith.constant 0 : i32
    %c0_i32_0 = arith.constant 0 : i32
    %c0_i32_1 = arith.constant 0 : i32
    return %c0_i32, %c0_i32_0 : i32, i32
  }
  func.func @transform_6(%arg0: i32) -> (i32, i32) {
    %c0_i32 = arith.constant 0 : i32
    %c0_i32_0 = arith.constant 0 : i32
    %c0_i32_1 = arith.constant 0 : i32
    return %c0_i32, %c0_i32_0 : i32, i32
  }
  func.func @transform_7(%arg0: i32) -> (i32, i32) {
    %c0_i32 = arith.constant 0 : i32
    %c0_i32_0 = arith.constant 0 : i32
    %c0_i32_1 = arith.constant 0 : i32
    return %c0_i32, %c0_i32_0 : i32, i32
  }
  func.func @transform_8(%arg0: i32) -> (i32, i32) {
    %c0_i32 = arith.constant 0 : i32
    %c0_i32_0 = arith.constant 0 : i32
    %c0_i32_1 = arith.constant 0 : i32
    return %c0_i32, %c0_i32_0 : i32, i32
  }
  func.func @transform_9(%arg0: i32) -> (i32, i32) {
    %c0_i32 = arith.constant 0 : i32
    %c0_i32_0 = arith.constant 0 : i32
    %c0_i32_1 = arith.constant 0 : i32
    return %c0_i32, %c0_i32_0 : i32, i32
  }
  func.func @transform_10(%arg0: i32) -> (i32, i32) {
    %c0_i32 = arith.constant 0 : i32
    %c0_i32_0 = arith.constant 0 : i32
    %c0_i32_1 = arith.constant 0 : i32
    return %c0_i32, %c0_i32_0 : i32, i32
  }
  func.func @transform_11(%arg0: i32) -> (i32, i32) {
    %c0_i32 = arith.constant 0 : i32
    %c0_i32_0 = arith.constant 0 : i32
    %c0_i32_1 = arith.constant 0 : i32
    return %c0_i32, %c0_i32_0 : i32, i32
  }
  func.func @transform_12(%arg0: i32) -> (i32, i32) {
    %c0_i32 = arith.constant 0 : i32
    %c0_i32_0 = arith.constant 0 : i32
    %c0_i32_1 = arith.constant 0 : i32
    return %c0_i32, %c0_i32_0 : i32, i32
  }
  func.func @transform_13(%arg0: i32) -> (i32, i32, i32) {
    %c0_i32 = arith.constant 0 : i32
    %c0_i32_0 = arith.constant 0 : i32
    %c0_i32_1 = arith.constant 0 : i32
    return %arg0, %c0_i32, %c0_i32_0 : i32, i32, i32
  }
}

</mosaic_0001>

<llo_original>
// kernel: tpu_custom_call.1
$region0: #{tpu_custom_call.1}
  #allocation0 [shape = 'u32[]', space=smem, size = 0x4, offset = 0x4, fixed_abs, tag = 'smem constant byte address 0x4 - core index']
  #allocation1 [shape = 'u32[144,128]{1,0:T(1,128)}', space=vmem, size = 0x12000, scoped, tag = 'internal scratch']
  %s0 = inlined_call_operand.vmem [shape: f32[2,16,64], index: 0, kind: input, shape index: {}]
  %s1 = inlined_call_operand.vmem [shape: bf16[64,192], index: 1, kind: input, shape index: {}]
  %s2 = inlined_call_operand.vmem [shape: bf16[64,64], index: 2, kind: input, shape index: {}]
  %s3 = inlined_call_operand.hbm [shape: f32[1,64], index: 3, kind: input, shape index: {}]
  %s4 = inlined_call_operand.hbm [shape: f32[1,64], index: 4, kind: input, shape index: {}]
  %s5 = inlined_call_operand.hbm [shape: f32[1,64], index: 5, kind: input, shape index: {}]
  %s6 = inlined_call_operand.vmem [shape: bf16[64,256], index: 6, kind: input, shape index: {}]
  %s7 = inlined_call_operand.vmem [shape: f32[1,256], index: 7, kind: input, shape index: {}]
  %s8 = inlined_call_operand.vmem [shape: bf16[256,64], index: 8, kind: input, shape index: {}]
  %s9 = inlined_call_operand.vmem [shape: f32[1,64], index: 9, kind: input, shape index: {}]
  %s10 = inlined_call_operand.vmem [shape: f32[1,64], index: 10, kind: input, shape index: {}]
  %s11 = inlined_call_operand.vmem [shape: f32[1,64], index: 11, kind: input, shape index: {}]
  %s12 = inlined_call_operand.vmem [shape: f32[16,16], index: 12, kind: input, shape index: {}]
  %s13 = inlined_call_operand.hbm [shape: f32[2,16,64], index: 13, kind: output, shape index: {}]
  %s14 = sld [smem:[#allocation0]]
  $region74: #{tpu_custom_call.1} parent=0
    _
  %s16 = ssub.s32 1, %s14
  %s17 = scalar_select 0, %s16, %s14
  $region1: #{tpu_custom_call.1} parent=0
    #allocation2 [shape = 'u8[512]{0}', space=vmem, size = 0x400, scoped, tag = 'input window, operand 3, single buffered']
    #allocation3 [shape = 's32[1]{0}', space=sflag, size = 0x4, scoped, tag = 'scoped memory for tpu_custom_call.1']
    #allocation4 [shape = 's32[1]{0}', space=sflag, size = 0x4, scoped, tag = 'scoped memory for tpu_custom_call.1']
    #allocation5 [shape = 'u8[512]{0}', space=vmem, size = 0x400, scoped, tag = 'input window, operand 4, single buffered']
    #allocation6 [shape = 's32[1]{0}', space=sflag, size = 0x4, scoped, tag = 'scoped memory for tpu_custom_call.1']
    #allocation7 [shape = 'u8[512]{0}', space=vmem, size = 0x400, scoped, tag = 'input window, operand 5, single buffered']
    #allocation8 [shape = 'u8[16384]{0}', space=vmem, size = 0x4000, scoped, tag = 'output window, operand 0, single buffered']
    %18 = vsyncpa [#allocation3], 0
    %19 = vsyncpa [#allocation6], 0
    %20 = vsyncpa [#allocation4], 0
    // Predicated region
    $region2: #{tpu_custom_call.1} parent=1 // pred_check
      _
    $region3: #{tpu_custom_call.1} parent=1 // pred_check_branch
      %22 = sbr.rel (0) target = $region5
    $region4: #{tpu_custom_call.1} parent=1 // pred_region
      _
    $region5: #{tpu_custom_call.1} parent=1 // pred_fallthru
      _
    // Predicated region
    $region6: #{tpu_custom_call.1} parent=1 // pred_check
      _
    $region7: #{tpu_custom_call.1} parent=1 // pred_check_branch
      %24 = sbr.rel (0) target = $region9
    $region8: #{tpu_custom_call.1} parent=1 // pred_region
      _
    $region9: #{tpu_custom_call.1} parent=1 // pred_fallthru
      _
    // Predicated region
    $region10: #{tpu_custom_call.1} parent=1 // pred_check
      _
    $region11: #{tpu_custom_call.1} parent=1 // pred_check_branch
      %26 = sbr.rel (0) target = $region13
    $region12: #{tpu_custom_call.1} parent=1 // pred_region
      _
    $region13: #{tpu_custom_call.1} parent=1 // pred_fallthru
      _
    // Predicated region
    $region14: #{tpu_custom_call.1} parent=1 // pred_check
      _
    $region15: #{tpu_custom_call.1} parent=1 // pred_check_branch
      %28 = sbr.rel (0) target = $region17
    $region16: #{tpu_custom_call.1} parent=1 // pred_region
      %s30 = ssub.s32 16, 16
      %31 = vsyncadd [#allocation3], %s30
      %s33 = sshll.u32 [#allocation2], 4
      %s34 = int_to_ptr.vmem [resolvable:$true] %s33
      %36 = dma.hbm_to_vmem [thread:$0]  %s3, 16, %s34, [#allocation3]
    $region17: #{tpu_custom_call.1} parent=1 // pred_fallthru
      _
    // Predicated region
    $region18: #{tpu_custom_call.1} parent=1 // pred_check
      _
    $region19: #{tpu_custom_call.1} parent=1 // pred_check_branch
      %38 = sbr.rel (0) target = $region21
    $region20: #{tpu_custom_call.1} parent=1 // pred_region
      %s40 = ssub.s32 16, 16
      %41 = vsyncadd [#allocation6], %s40
      %s43 = sshll.u32 [#allocation5], 4
      %s44 = int_to_ptr.vmem [resolvable:$true] %s43
      %46 = dma.hbm_to_vmem [thread:$0]  %s4, 16, %s44, [#allocation6]
    $region21: #{tpu_custom_call.1} parent=1 // pred_fallthru
      _
    // Predicated region
    $region22: #{tpu_custom_call.1} parent=1 // pred_check
      _
    $region23: #{tpu_custom_call.1} parent=1 // pred_check_branch
      %48 = sbr.rel (0) target = $region25
    $region24: #{tpu_custom_call.1} parent=1 // pred_region
      %s50 = ssub.s32 16, 16
      %51 = vsyncadd [#allocation6], %s50
      %s53 = sshll.u32 [#allocation7], 4
      %s54 = int_to_ptr.vmem [resolvable:$true] %s53
      %56 = dma.hbm_to_vmem [thread:$0]  %s5, 16, %s54, [#allocation6]
    $region25: #{tpu_custom_call.1} parent=1 // pred_fallthru
      _
    // Predicated region
    $region26: #{tpu_custom_call.1} parent=1 // pred_check
      _
    $region27: #{tpu_custom_call.1} parent=1 // pred_check_branch
      %58 = sbr.rel (0) target = $region29
    $region28: #{tpu_custom_call.1} parent=1 // pred_region
      _
    $region29: #{tpu_custom_call.1} parent=1 // pred_fallthru
      _
    // Predicated region
    $region30: #{tpu_custom_call.1} parent=1 // pred_check
      _
    $region31: #{tpu_custom_call.1} parent=1 // pred_check_branch
      %60 = sbr.rel (0) target = $region33
    $region32: #{tpu_custom_call.1} parent=1 // pred_region
      _
    $region33: #{tpu_custom_call.1} parent=1 // pred_fallthru
      _
    // Predicated region
    $region34: #{tpu_custom_call.1} parent=1 // pred_check
      _
    $region35: #{tpu_custom_call.1} parent=1 // pred_check_branch
      %62 = sbr.rel (0) target = $region37
    $region36: #{tpu_custom_call.1} parent=1 // pred_region
      _
    $region37: #{tpu_custom_call.1} parent=1 // pred_fallthru
      _
    // Predicated region
    $region38: #{tpu_custom_call.1} parent=1 // pred_check
      _
    $region39: #{tpu_custom_call.1} parent=1 // pred_check_branch
      %64 = sbr.rel (0) target = $region41
    $region40: #{tpu_custom_call.1} parent=1 // pred_region
      _
    $region41: #{tpu_custom_call.1} parent=1 // pred_fallthru
      _
    // Predicated region
    $region42: #{tpu_custom_call.1} parent=1 // pred_check
      _
    $region43: #{tpu_custom_call.1} parent=1 // pred_check_branch
      %66 = sbr.rel (0) target = $region45
    $region44: #{tpu_custom_call.1} parent=1 // pred_region
      _
    $region45: #{tpu_custom_call.1} parent=1 // pred_fallthru
      _
    // Predicated region
    $region46: #{tpu_custom_call.1} parent=1 // pred_check
      _
    $region47: #{tpu_custom_call.1} parent=1 // pred_check_branch
      %68 = sbr.rel (0) target = $region49
    $region48: #{tpu_custom_call.1} parent=1 // pred_region
      _
    $region49: #{tpu_custom_call.1} parent=1 // pred_fallthru
      _
    // Predicated region
    $region50: #{tpu_custom_call.1} parent=1 // pred_check
      _
    $region51: #{tpu_custom_call.1} parent=1 // pred_check_branch
      %70 = sbr.rel (0) target = $region53
    $region52: #{tpu_custom_call.1} parent=1 // pred_region
      _
    $region53: #{tpu_custom_call.1} parent=1 // pred_fallthru
      _
    // Predicated region
    $region54: #{tpu_custom_call.1} parent=1 // pred_check
      _
    $region55: #{tpu_custom_call.1} parent=1 // pred_check_branch
      %72 = sbr.rel (0) target = $region57
    $region56: #{tpu_custom_call.1} parent=1 // pred_region
      %73 = dma.done [#allocation3], 16
    $region57: #{tpu_custom_call.1} parent=1 // pred_fallthru
      _
    // Predicated region
    $region58: #{tpu_custom_call.1} parent=1 // pred_check
      _
    $region59: #{tpu_custom_call.1} parent=1 // pred_check_branch
      %75 = sbr.rel (0) target = $region61
    $region60: #{tpu_custom_call.1} parent=1 // pred_region
      %76 = dma.done [#allocation6], 16
    $region61: #{tpu_custom_call.1} parent=1 // pred_fallthru
      _
    // Predicated region
    $region62: #{tpu_custom_call.1} parent=1 // pred_check
      _
    $region63: #{tpu_custom_call.1} parent=1 // pred_check_branch
      %78 = sbr.rel (0) target = $region65
    $region64: #{tpu_custom_call.1} parent=1 // pred_region
      %79 = dma.done [#allocation6], 16
    $region65: #{tpu_custom_call.1} parent=1 // pred_fallthru
      _
    %v81 = vld [vmem:[%s0] sm:$0xff]
    %v82 = vld [vmem:[%s0 + $0x8] sm:$0xff]
    %v83 = vld [vmem:[%s0 + $0x10] sm:$0xff]
    %v84 = vld [vmem:[%s0 + $0x18] sm:$0xff]
    %v85 = vpack.c.bf16 %v82, %v81
    %v86 = vpack.c.bf16 %v84, %v83
    %v87 = vld [vmem:[%s1] sm:$0xff]
    %v88 = vld [vmem:[%s1 + $0x8] sm:$0xff]
    %v89 = vld [vmem:[%s1 + $0x10] sm:$0xff]
    %v90 = vld [vmem:[%s1 + $0x18] sm:$0xff]
    %v91 = vld [vmem:[%s1 + $0x20] sm:$0xff]
    %v92 = vld [vmem:[%s1 + $0x28] sm:$0xff]
    %v93 = vld [vmem:[%s1 + $0x30] sm:$0xff]
    %v94 = vld [vmem:[%s1 + $0x38] sm:$0xff]
    %v103 = vunpack.c.l.b16 %v87
    %v104 = vunpack.c.h.b16 %v87
    %v105 = vunpack.c.l.b16 %v88
    %v106 = vunpack.c.h.b16 %v88
    %v107 = vunpack.c.l.b16 %v89
    %v108 = vunpack.c.h.b16 %v89
    %v109 = vunpack.c.l.b16 %v90
    %v110 = vunpack.c.h.b16 %v90
    %v111 = vunpack.c.l.b16 %v91
    %v112 = vunpack.c.h.b16 %v91
    %v113 = vunpack.c.l.b16 %v92
    %v114 = vunpack.c.h.b16 %v92
    %v115 = vunpack.c.l.b16 %v93
    %v116 = vunpack.c.h.b16 %v93
    %v117 = vunpack.c.l.b16 %v94
    %v118 = vunpack.c.h.b16 %v94
    %v119 = vpack.c.b16 %v105, %v103
    %v120 = vpack.c.b16 %v106, %v104
    %v121 = vpack.c.b16 %v109, %v107
    %v122 = vpack.c.b16 %v110, %v108
    %v123 = vpack.c.b16 %v113, %v111
    %v124 = vpack.c.b16 %v114, %v112
    %v125 = vpack.c.b16 %v117, %v115
    %v126 = vpack.c.b16 %v118, %v116
    %vm135 = vcmask 523264
    %v137 = vsel %vm135, %v85, 0
    %v140 = vsel %vm135, %v86, 0
    %142 = vmatprep.subr.bf16.mxu0 %v120
    %143 = vmatpush1.bf16.msra.mxu0 %v119
    %144 = vmatprep.subr.bf16.mxu0 %v122
    %145 = vmatpush1.bf16.msra.mxu0 %v121
    %146 = vmatprep.subr.bf16.mxu0 %v124
    %147 = vmatpush1.bf16.msra.mxu0 %v123
    %148 = vmatprep.subr.bf16.mxu0 %v126
    %149 = vmatpush1.bf16.msra.mxu0 %v125
    %150 = vmatprep.subr.bf16.mxu0 0
    %151 = vmatpush1.bf16.msra.mxu0 0
    %152 = vmatprep.subr.bf16.mxu0 0
    %153 = vmatpush1.bf16.msra.mxu0 0
    %154 = vmatprep.subr.bf16.mxu0 0
    %155 = vmatpush1.bf16.msra.mxu0 0
    %156 = vmatprep.subr.bf16.mxu0 0
    %157 = vmatpush1.bf16.msra.mxu0 0
    %158 = vmatprep.subr.bf16.mxu0 0
    %159 = vmatpush1.bf16.msra.mxu0 0
    %160 = vmatprep.subr.bf16.mxu0 0
    %161 = vmatpush1.bf16.msra.mxu0 0
    %162 = vmatprep.subr.bf16.mxu0 0
    %163 = vmatpush1.bf16.msra.mxu0 0
    %164 = vmatprep.subr.bf16.mxu0 0
    %165 = vmatpush1.bf16.msra.mxu0 0
    %166 = vmatprep.subr.bf16.mxu0 0
    %167 = vmatpush1.bf16.msra.mxu0 0
    %168 = vmatprep.subr.bf16.mxu0 0
    %169 = vmatpush1.bf16.msra.mxu0 0
    %170 = vmatprep.subr.bf16.mxu0 0
    %171 = vmatpush1.bf16.msra.mxu0 0
    %172 = vmatprep.subr.bf16.mxu0 0
    %173 = vmatpush1.bf16.msra.mxu0 0
    %174 = vmatprep.mubr.bf16.mxu0 0
    %175 = vmatmul.mubr.bf16.gmra.mrb[0].mxu0 %v137
    %v176 = vpop.f32.mrb[0].mxu0
    %v177 = vadd.f32 0.0, %v176
    %v178 = vpop.f32.mrb[0].mxu0
    %v179 = vadd.f32 0.0, %v178
    %v180 = vpop.f32.mrb[0].mxu0
    %v181 = vadd.f32 0.0, %v180
    %v182 = vpop.f32.mrb[0].mxu0
    %v183 = vadd.f32 0.0, %v182
    %184 = vmatprep.mubr.bf16.mxu0 0
    %185 = vmatmul.mubr.bf16.gmra.mrb[0].mxu0 %v140
    %v186 = vpop.f32.mrb[0].mxu0
    %v187 = vadd.f32 0.0, %v186
    %v188 = vpop.f32.mrb[0].mxu0
    %v189 = vadd.f32 0.0, %v188
    %v190 = vpop.f32.mrb[0].mxu0
    %v191 = vadd.f32 0.0, %v190
    %v192 = vpop.f32.mrb[0].mxu0
    %v193 = vadd.f32 0.0, %v192
    %194 = vdwg.mxu0
    %v195 = vpack.c.bf16 %v181, %v177
    %v196 = vpack.c.bf16 %v183, %v179
    %v197 = vpack.c.bf16 %v191, %v187
    %v198 = vpack.c.bf16 %v193, %v189
    %200 = vrot.lane.b32.xlu0 %v195, 112
    %v201 = vpop.permute.xlu0 %200
    %202 = vrot.lane.b32.xlu0 %v195, 96
    %v203 = vpop.permute.xlu0 %202
    %204 = vrot.lane.b32.xlu0 %v195, 80
    %v205 = vpop.permute.xlu0 %204
    %207 = vrot.lane.b32.xlu0 %v197, 112
    %v208 = vpop.permute.xlu0 %207
    %209 = vrot.lane.b32.xlu0 %v197, 96
    %v210 = vpop.permute.xlu0 %209
    %211 = vrot.lane.b32.xlu0 %v197, 80
    %v212 = vpop.permute.xlu0 %211
    %214 = vrot.lane.b32.xlu0 %v196, 112
    %v215 = vpop.permute.xlu0 %214
    %217 = vrot.lane.b32.xlu0 %v196, 96
    %v218 = vpop.permute.xlu0 %217
    %220 = vrot.lane.b32.xlu0 %v196, 80
    %v221 = vpop.permute.xlu0 %220
    %224 = vrot.lane.b32.xlu0 %v198, 112
    %v225 = vpop.permute.xlu0 %224
    %227 = vrot.lane.b32.xlu0 %v198, 96
    %v228 = vpop.permute.xlu0 %227
    %230 = vrot.lane.b32.xlu0 %v198, 80
    %v231 = vpop.permute.xlu0 %230
    %v233 = vld [vmem:[%s12] sm:$0xff]
    %v234 = vld [vmem:[%s12 + $0x8] sm:$0xff]
    %235 = vrot.lane.b32.xlu0 %v195, 64
    %v236 = vpop.permute.xlu0 %235
    %vm237 = vcmask 130048
    %v239 = vsel %vm237, %v195, 0
    %v242 = vsel %vm237, %v236, 0
    %244 = vmatprep.subr.bf16.mxu0 0
    %245 = vmatpush1.bf16.xpose.msra.mxu0 %v242
    %246 = vmatprep.subr.bf16.mxu0 0
    %247 = vmatpush1.bf16.xpose.msra.mxu0 0
    %248 = vmatprep.subr.bf16.mxu0 0
    %249 = vmatpush1.bf16.xpose.msra.mxu0 0
    %250 = vmatprep.subr.bf16.mxu0 0
    %251 = vmatpush1.bf16.xpose.msra.mxu0 0
    %252 = vmatprep.subr.bf16.mxu0 0
    %253 = vmatpush1.bf16.xpose.msra.mxu0 0
    %254 = vmatprep.subr.bf16.mxu0 0
    %255 = vmatpush1.bf16.xpose.msra.mxu0 0
    %256 = vmatprep.subr.bf16.mxu0 0
    %257 = vmatpush1.bf16.xpose.msra.mxu0 0
    %258 = vmatprep.subr.bf16.mxu0 0
    %259 = vmatpush1.bf16.xpose.msra.mxu0 0
    %260 = vmatprep.subr.bf16.mxu0 0
    %261 = vmatpush1.bf16.xpose.msra.mxu0 0
    %262 = vmatprep.subr.bf16.mxu0 0
    %263 = vmatpush1.bf16.xpose.msra.mxu0 0
    %264 = vmatprep.subr.bf16.mxu0 0
    %265 = vmatpush1.bf16.xpose.msra.mxu0 0
    %266 = vmatprep.subr.bf16.mxu0 0
    %267 = vmatpush1.bf16.xpose.msra.mxu0 0
    %268 = vmatprep.subr.bf16.mxu0 0
    %269 = vmatpush1.bf16.xpose.msra.mxu0 0
    %270 = vmatprep.subr.bf16.mxu0 0
    %271 = vmatpush1.bf16.xpose.msra.mxu0 0
    %272 = vmatprep.subr.bf16.mxu0 0
    %273 = vmatpush1.bf16.xpose.msra.mxu0 0
    %274 = vmatprep.subr.bf16.mxu0 0
    %275 = vmatpush1.bf16.xpose.msra.mxu0 0
    %276 = vmatprep.mubr.bf16.mxu0 0
    %277 = vmatmul.mubr.bf16.gmra.mrb[0].mxu0 %v239
    %v278 = vpop.f32.mrb[0].mxu0
    %v279 = vadd.f32 %v233, %v278
    %v280 = vpop.f32.mrb[0].mxu0
    %v281 = vpop.f32.mrb[0].mxu0
    %v282 = vadd.f32 %v234, %v281
    %v283 = vpop.f32.mrb[0].mxu0
    %284 = vdwg.mxu0
    %285 = vrot.lane.b32.xlu0 %v201, 64
    %v286 = vpop.permute.xlu0 %285
    %v288 = vsel %vm237, %v201, 0
    %v291 = vsel %vm237, %v286, 0
    %293 = vmatprep.subr.bf16.mxu0 0
    %294 = vmatpush1.bf16.xpose.msra.mxu0 %v291
    %295 = vmatprep.subr.bf16.mxu0 0
    %296 = vmatpush1.bf16.xpose.msra.mxu0 0
    %297 = vmatprep.subr.bf16.mxu0 0
    %298 = vmatpush1.bf16.xpose.msra.mxu0 0
    %299 = vmatprep.subr.bf16.mxu0 0
    %300 = vmatpush1.bf16.xpose.msra.mxu0 0
    %301 = vmatprep.subr.bf16.mxu0 0
    %302 = vmatpush1.bf16.xpose.msra.mxu0 0
    %303 = vmatprep.subr.bf16.mxu0 0
    %304 = vmatpush1.bf16.xpose.msra.mxu0 0
    %305 = vmatprep.subr.bf16.mxu0 0
    %306 = vmatpush1.bf16.xpose.msra.mxu0 0
    %307 = vmatprep.subr.bf16.mxu0 0
    %308 = vmatpush1.bf16.xpose.msra.mxu0 0
    %309 = vmatprep.subr.bf16.mxu0 0
    %310 = vmatpush1.bf16.xpose.msra.mxu0 0
    %311 = vmatprep.subr.bf16.mxu0 0
    %312 = vmatpush1.bf16.xpose.msra.mxu0 0
    %313 = vmatprep.subr.bf16.mxu0 0
    %314 = vmatpush1.bf16.xpose.msra.mxu0 0
    %315 = vmatprep.subr.bf16.mxu0 0
    %316 = vmatpush1.bf16.xpose.msra.mxu0 0
    %317 = vmatprep.subr.bf16.mxu0 0
    %318 = vmatpush1.bf16.xpose.msra.mxu0 0
    %319 = vmatprep.subr.bf16.mxu0 0
    %320 = vmatpush1.bf16.xpose.msra.mxu0 0
    %321 = vmatprep.subr.bf16.mxu0 0
    %322 = vmatpush1.bf16.xpose.msra.mxu0 0
    %323 = vmatprep.subr.bf16.mxu0 0
    %324 = vmatpush1.bf16.xpose.msra.mxu0 0
    %325 = vmatprep.mubr.bf16.mxu0 0
    %326 = vmatmul.mubr.bf16.gmra.mrb[0].mxu0 %v288
    %v327 = vpop.f32.mrb[0].mxu0
    %v328 = vadd.f32 %v233, %v327
    %v329 = vpop.f32.mrb[0].mxu0
    %v330 = vpop.f32.mrb[0].mxu0
    %v331 = vadd.f32 %v234, %v330
    %v332 = vpop.f32.mrb[0].mxu0
    %333 = vdwg.mxu0
    %334 = vrot.lane.b32.xlu0 %v203, 64
    %v335 = vpop.permute.xlu0 %334
    %v337 = vsel %vm237, %v203, 0
    %v340 = vsel %vm237, %v335, 0
    %342 = vmatprep.subr.bf16.mxu0 0
    %343 = vmatpush1.bf16.xpose.msra.mxu0 %v340
    %344 = vmatprep.subr.bf16.mxu0 0
    %345 = vmatpush1.bf16.xpose.msra.mxu0 0
    %346 = vmatprep.subr.bf16.mxu0 0
    %347 = vmatpush1.bf16.xpose.msra.mxu0 0
    %348 = vmatprep.subr.bf16.mxu0 0
    %349 = vmatpush1.bf16.xpose.msra.mxu0 0
    %350 = vmatprep.subr.bf16.mxu0 0
    %351 = vmatpush1.bf16.xpose.msra.mxu0 0
    %352 = vmatprep.subr.bf16.mxu0 0
    %353 = vmatpush1.bf16.xpose.msra.mxu0 0
    %354 = vmatprep.subr.bf16.mxu0 0
    %355 = vmatpush1.bf16.xpose.msra.mxu0 0
    %356 = vmatprep.subr.bf16.mxu0 0
    %357 = vmatpush1.bf16.xpose.msra.mxu0 0
    %358 = vmatprep.subr.bf16.mxu0 0
    %359 = vmatpush1.bf16.xpose.msra.mxu0 0
    %360 = vmatprep.subr.bf16.mxu0 0
    %361 = vmatpush1.bf16.xpose.msra.mxu0 0
    %362 = vmatprep.subr.bf16.mxu0 0
    %363 = vmatpush1.bf16.xpose.msra.mxu0 0
    %364 = vmatprep.subr.bf16.mxu0 0
    %365 = vmatpush1.bf16.xpose.msra.mxu0 0
    %366 = vmatprep.subr.bf16.mxu0 0
    %367 = vmatpush1.bf16.xpose.msra.mxu0 0
    %368 = vmatprep.subr.bf16.mxu0 0
    %369 = vmatpush1.bf16.xpose.msra.mxu0 0
    %370 = vmatprep.subr.bf16.mxu0 0
    %371 = vmatpush1.bf16.xpose.msra.mxu0 0
    %372 = vmatprep.subr.bf16.mxu0 0
    %373 = vmatpush1.bf16.xpose.msra.mxu0 0
    %374 = vmatprep.mubr.bf16.mxu0 0
    %375 = vmatmul.mubr.bf16.gmra.mrb[0].mxu0 %v337
    %v376 = vpop.f32.mrb[0].mxu0
    %v377 = vadd.f32 %v233, %v376
    %v378 = vpop.f32.mrb[0].mxu0
    %v379 = vpop.f32.mrb[0].mxu0
    %v380 = vadd.f32 %v234, %v379
    %v381 = vpop.f32.mrb[0].mxu0
    %382 = vdwg.mxu0
    %383 = vrot.lane.b32.xlu0 %v205, 64
    %v384 = vpop.permute.xlu0 %383
    %v386 = vsel %vm237, %v205, 0
    %v389 = vsel %vm237, %v384, 0
    %391 = vmatprep.subr.bf16.mxu0 0
    %392 = vmatpush1.bf16.xpose.msra.mxu0 %v389
    %393 = vmatprep.subr.bf16.mxu0 0
    %394 = vmatpush1.bf16.xpose.msra.mxu0 0
    %395 = vmatprep.subr.bf16.mxu0 0
    %396 = vmatpush1.bf16.xpose.msra.mxu0 0
    %397 = vmatprep.subr.bf16.mxu0 0
    %398 = vmatpush1.bf16.xpose.msra.mxu0 0
    %399 = vmatprep.subr.bf16.mxu0 0
    %400 = vmatpush1.bf16.xpose.msra.mxu0 0
    %401 = vmatprep.subr.bf16.mxu0 0
    %402 = vmatpush1.bf16.xpose.msra.mxu0 0
    %403 = vmatprep.subr.bf16.mxu0 0
    %404 = vmatpush1.bf16.xpose.msra.mxu0 0
    %405 = vmatprep.subr.bf16.mxu0 0
    %406 = vmatpush1.bf16.xpose.msra.mxu0 0
    %407 = vmatprep.subr.bf16.mxu0 0
    %408 = vmatpush1.bf16.xpose.msra.mxu0 0
    %409 = vmatprep.subr.bf16.mxu0 0
    %410 = vmatpush1.bf16.xpose.msra.mxu0 0
    %411 = vmatprep.subr.bf16.mxu0 0
    %412 = vmatpush1.bf16.xpose.msra.mxu0 0
    %413 = vmatprep.subr.bf16.mxu0 0
    %414 = vmatpush1.bf16.xpose.msra.mxu0 0
    %415 = vmatprep.subr.bf16.mxu0 0
    %416 = vmatpush1.bf16.xpose.msra.mxu0 0
    %417 = vmatprep.subr.bf16.mxu0 0
    %418 = vmatpush1.bf16.xpose.msra.mxu0 0
    %419 = vmatprep.subr.bf16.mxu0 0
    %420 = vmatpush1.bf16.xpose.msra.mxu0 0
    %421 = vmatprep.subr.bf16.mxu0 0
    %422 = vmatpush1.bf16.xpose.msra.mxu0 0
    %423 = vmatprep.mubr.bf16.mxu0 0
    %424 = vmatmul.mubr.bf16.gmra.mrb[0].mxu0 %v386
    %v425 = vpop.f32.mrb[0].mxu0
    %v426 = vadd.f32 %v233, %v425
    %v427 = vpop.f32.mrb[0].mxu0
    %v428 = vpop.f32.mrb[0].mxu0
    %v429 = vadd.f32 %v234, %v428
    %v430 = vpop.f32.mrb[0].mxu0
    %431 = vdwg.mxu0
    %432 = vrot.lane.b32.xlu0 %v197, 64
    %v433 = vpop.permute.xlu0 %432
    %v435 = vsel %vm237, %v197, 0
    %v438 = vsel %vm237, %v433, 0
    %440 = vmatprep.subr.bf16.mxu0 0
    %441 = vmatpush1.bf16.xpose.msra.mxu0 %v438
    %442 = vmatprep.subr.bf16.mxu0 0
    %443 = vmatpush1.bf16.xpose.msra.mxu0 0
    %444 = vmatprep.subr.bf16.mxu0 0
    %445 = vmatpush1.bf16.xpose.msra.mxu0 0
    %446 = vmatprep.subr.bf16.mxu0 0
    %447 = vmatpush1.bf16.xpose.msra.mxu0 0
    %448 = vmatprep.subr.bf16.mxu0 0
    %449 = vmatpush1.bf16.xpose.msra.mxu0 0
    %450 = vmatprep.subr.bf16.mxu0 0
    %451 = vmatpush1.bf16.xpose.msra.mxu0 0
    %452 = vmatprep.subr.bf16.mxu0 0
    %453 = vmatpush1.bf16.xpose.msra.mxu0 0
    %454 = vmatprep.subr.bf16.mxu0 0
    %455 = vmatpush1.bf16.xpose.msra.mxu0 0
    %456 = vmatprep.subr.bf16.mxu0 0
    %457 = vmatpush1.bf16.xpose.msra.mxu0 0
    %458 = vmatprep.subr.bf16.mxu0 0
    %459 = vmatpush1.bf16.xpose.msra.mxu0 0
    %460 = vmatprep.subr.bf16.mxu0 0
    %461 = vmatpush1.bf16.xpose.msra.mxu0 0
    %462 = vmatprep.subr.bf16.mxu0 0
    %463 = vmatpush1.bf16.xpose.msra.mxu0 0
    %464 = vmatprep.subr.bf16.mxu0 0
    %465 = vmatpush1.bf16.xpose.msra.mxu0 0
    %466 = vmatprep.subr.bf16.mxu0 0
    %467 = vmatpush1.bf16.xpose.msra.mxu0 0
    %468 = vmatprep.subr.bf16.mxu0 0
    %469 = vmatpush1.bf16.xpose.msra.mxu0 0
    %470 = vmatprep.subr.bf16.mxu0 0
    %471 = vmatpush1.bf16.xpose.msra.mxu0 0
    %472 = vmatprep.mubr.bf16.mxu0 0
    %473 = vmatmul.mubr.bf16.gmra.mrb[0].mxu0 %v435
    %v474 = vpop.f32.mrb[0].mxu0
    %v475 = vadd.f32 %v233, %v474
    %v476 = vpop.f32.mrb[0].mxu0
    %v477 = vpop.f32.mrb[0].mxu0
    %v478 = vadd.f32 %v234, %v477
    %v479 = vpop.f32.mrb[0].mxu0
    %480 = vdwg.mxu0
    %481 = vrot.lane.b32.xlu0 %v208, 64
    %v482 = vpop.permute.xlu0 %481
    %v484 = vsel %vm237, %v208, 0
    %v487 = vsel %vm237, %v482, 0
    %489 = vmatprep.subr.bf16.mxu0 0
    %490 = vmatpush1.bf16.xpose.msra.mxu0 %v487
    %491 = vmatprep.subr.bf16.mxu0 0
    %492 = vmatpush1.bf16.xpose.msra.mxu0 0
    %493 = vmatprep.subr.bf16.mxu0 0
    %494 = vmatpush1.bf16.xpose.msra.mxu0 0
    %495 = vmatprep.subr.bf16.mxu0 0
    %496 = vmatpush1.bf16.xpose.msra.mxu0 0
    %497 = vmatprep.subr.bf16.mxu0 0
    %498 = vmatpush1.bf16.xpose.msra.mxu0 0
    %499 = vmatprep.subr.bf16.mxu0 0
    %500 = vmatpush1.bf16.xpose.msra.mxu0 0
    %501 = vmatprep.subr.bf16.mxu0 0
    %502 = vmatpush1.bf16.xpose.msra.mxu0 0
    %503 = vmatprep.subr.bf16.mxu0 0
    %504 = vmatpush1.bf16.xpose.msra.mxu0 0
    %505 = vmatprep.subr.bf16.mxu0 0
    %506 = vmatpush1.bf16.xpose.msra.mxu0 0
    %507 = vmatprep.subr.bf16.mxu0 0
    %508 = vmatpush1.bf16.xpose.msra.mxu0 0
    %509 = vmatprep.subr.bf16.mxu0 0
    %510 = vmatpush1.bf16.xpose.msra.mxu0 0
    %511 = vmatprep.subr.bf16.mxu0 0
    %512 = vmatpush1.bf16.xpose.msra.mxu0 0
    %513 = vmatprep.subr.bf16.mxu0 0
    %514 = vmatpush1.bf16.xpose.msra.mxu0 0
    %515 = vmatprep.subr.bf16.mxu0 0
    %516 = vmatpush1.bf16.xpose.msra.mxu0 0
    %517 = vmatprep.subr.bf16.mxu0 0
    %518 = vmatpush1.bf16.xpose.msra.mxu0 0
    %519 = vmatprep.subr.bf16.mxu0 0
    %520 = vmatpush1.bf16.xpose.msra.mxu0 0
    %521 = vmatprep.mubr.bf16.mxu0 0
    %522 = vmatmul.mubr.bf16.gmra.mrb[0].mxu0 %v484
    %v523 = vpop.f32.mrb[0].mxu0
    %v524 = vadd.f32 %v233, %v523
    %v525 = vpop.f32.mrb[0].mxu0
    %v526 = vpop.f32.mrb[0].mxu0
    %v527 = vadd.f32 %v234, %v526
    %v528 = vpop.f32.mrb[0].mxu0
    %529 = vdwg.mxu0
    %530 = vrot.lane.b32.xlu0 %v210, 64
    %v531 = vpop.permute.xlu0 %530
    %v533 = vsel %vm237, %v210, 0
    %v536 = vsel %vm237, %v531, 0
    %538 = vmatprep.subr.bf16.mxu0 0
    %539 = vmatpush1.bf16.xpose.msra.mxu0 %v536
    %540 = vmatprep.subr.bf16.mxu0 0
    %541 = vmatpush1.bf16.xpose.msra.mxu0 0
    %542 = vmatprep.subr.bf16.mxu0 0
    %543 = vmatpush1.bf16.xpose.msra.mxu0 0
    %544 = vmatprep.subr.bf16.mxu0 0
    %545 = vmatpush1.bf16.xpose.msra.mxu0 0
    %546 = vmatprep.subr.bf16.mxu0 0
    %547 = vmatpush1.bf16.xpose.msra.mxu0 0
    %548 = vmatprep.subr.bf16.mxu0 0
    %549 = vmatpush1.bf16.xpose.msra.mxu0 0
    %550 = vmatprep.subr.bf16.mxu0 0
    %551 = vmatpush1.bf16.xpose.msra.mxu0 0
    %552 = vmatprep.subr.bf16.mxu0 0
    %553 = vmatpush1.bf16.xpose.msra.mxu0 0
    %554 = vmatprep.subr.bf16.mxu0 0
    %555 = vmatpush1.bf16.xpose.msra.mxu0 0
    %556 = vmatprep.subr.bf16.mxu0 0
    %557 = vmatpush1.bf16.xpose.msra.mxu0 0
    %558 = vmatprep.subr.bf16.mxu0 0
    %559 = vmatpush1.bf16.xpose.msra.mxu0 0
    %560 = vmatprep.subr.bf16.mxu0 0
    %561 = vmatpush1.bf16.xpose.msra.mxu0 0
    %562 = vmatprep.subr.bf16.mxu0 0
    %563 = vmatpush1.bf16.xpose.msra.mxu0 0
    %564 = vmatprep.subr.bf16.mxu0 0
    %565 = vmatpush1.bf16.xpose.msra.mxu0 0
    %566 = vmatprep.subr.bf16.mxu0 0
    %567 = vmatpush1.bf16.xpose.msra.mxu0 0
    %568 = vmatprep.subr.bf16.mxu0 0
    %569 = vmatpush1.bf16.xpose.msra.mxu0 0
    %570 = vmatprep.mubr.bf16.mxu0 0
    %571 = vmatmul.mubr.bf16.gmra.mrb[0].mxu0 %v533
    %v572 = vpop.f32.mrb[0].mxu0
    %v573 = vadd.f32 %v233, %v572
    %v574 = vpop.f32.mrb[0].mxu0
    %v575 = vpop.f32.mrb[0].mxu0
    %v576 = vadd.f32 %v234, %v575
    %v577 = vpop.f32.mrb[0].mxu0
    %578 = vdwg.mxu0
    %579 = vrot.lane.b32.xlu0 %v212, 64
    %v580 = vpop.permute.xlu0 %579
    %v582 = vsel %vm237, %v212, 0
    %v585 = vsel %vm237, %v580, 0
    %587 = vmatprep.subr.bf16.mxu0 0
    %588 = vmatpush1.bf16.xpose.msra.mxu0 %v585
    %589 = vmatprep.subr.bf16.mxu0 0
    %590 = vmatpush1.bf16.xpose.msra.mxu0 0
    %591 = vmatprep.subr.bf16.mxu0 0
    %592 = vmatpush1.bf16.xpose.msra.mxu0 0
    %593 = vmatprep.subr.bf16.mxu0 0
    %594 = vmatpush1.bf16.xpose.msra.mxu0 0
    %595 = vmatprep.subr.bf16.mxu0 0
    %596 = vmatpush1.bf16.xpose.msra.mxu0 0
    %597 = vmatprep.subr.bf16.mxu0 0
    %598 = vmatpush1.bf16.xpose.msra.mxu0 0
    %599 = vmatprep.subr.bf16.mxu0 0
    %600 = vmatpush1.bf16.xpose.msra.mxu0 0
    %601 = vmatprep.subr.bf16.mxu0 0
    %602 = vmatpush1.bf16.xpose.msra.mxu0 0
    %603 = vmatprep.subr.bf16.mxu0 0
    %604 = vmatpush1.bf16.xpose.msra.mxu0 0
    %605 = vmatprep.subr.bf16.mxu0 0
    %606 = vmatpush1.bf16.xpose.msra.mxu0 0
    %607 = vmatprep.subr.bf16.mxu0 0
    %608 = vmatpush1.bf16.xpose.msra.mxu0 0
    %609 = vmatprep.subr.bf16.mxu0 0
    %610 = vmatpush1.bf16.xpose.msra.mxu0 0
    %611 = vmatprep.subr.bf16.mxu0 0
    %612 = vmatpush1.bf16.xpose.msra.mxu0 0
    %613 = vmatprep.subr.bf16.mxu0 0
    %614 = vmatpush1.bf16.xpose.msra.mxu0 0
    %615 = vmatprep.subr.bf16.mxu0 0
    %616 = vmatpush1.bf16.xpose.msra.mxu0 0
    %617 = vmatprep.subr.bf16.mxu0 0
    %618 = vmatpush1.bf16.xpose.msra.mxu0 0
    %619 = vmatprep.mubr.bf16.mxu0 0
    %620 = vmatmul.mubr.bf16.gmra.mrb[0].mxu0 %v582
    %v621 = vpop.f32.mrb[0].mxu0
    %v622 = vadd.f32 %v233, %v621
    %v623 = vpop.f32.mrb[0].mxu0
    %v624 = vpop.f32.mrb[0].mxu0
    %v625 = vadd.f32 %v234, %v624
    %v626 = vpop.f32.mrb[0].mxu0
    %627 = vdwg.mxu0
    %v628 = vsel %vm237, %v279, -inf
    %629 = vmax.xlane.f32.xlu0 %v628
    %v630 = vpop.xlane.xlu0 %629
    %v631 = vsel %vm237, %v282, -inf
    %632 = vmax.xlane.f32.xlu0 %v631
    %v633 = vpop.xlane.xlu0 %632
    %v634 = vsel %vm237, %v328, -inf
    %635 = vmax.xlane.f32.xlu0 %v634
    %v636 = vpop.xlane.xlu0 %635
    %v637 = vsel %vm237, %v331, -inf
    %638 = vmax.xlane.f32.xlu0 %v637
    %v639 = vpop.xlane.xlu0 %638
    %v640 = vsel %vm237, %v377, -inf
    %641 = vmax.xlane.f32.xlu0 %v640
    %v642 = vpop.xlane.xlu0 %641
    %v643 = vsel %vm237, %v380, -inf
    %644 = vmax.xlane.f32.xlu0 %v643
    %v645 = vpop.xlane.xlu0 %644
    %v646 = vsel %vm237, %v426, -inf
    %647 = vmax.xlane.f32.xlu0 %v646
    %v648 = vpop.xlane.xlu0 %647
    %v649 = vsel %vm237, %v429, -inf
    %650 = vmax.xlane.f32.xlu0 %v649
    %v651 = vpop.xlane.xlu0 %650
    %v652 = vsel %vm237, %v475, -inf
    %653 = vmax.xlane.f32.xlu0 %v652
    %v654 = vpop.xlane.xlu0 %653
    %v655 = vsel %vm237, %v478, -inf
    %656 = vmax.xlane.f32.xlu0 %v655
    %v657 = vpop.xlane.xlu0 %656
    %v658 = vsel %vm237, %v524, -inf
    %659 = vmax.xlane.f32.xlu0 %v658
    %v660 = vpop.xlane.xlu0 %659
    %v661 = vsel %vm237, %v527, -inf
    %662 = vmax.xlane.f32.xlu0 %v661
    %v663 = vpop.xlane.xlu0 %662
    %v664 = vsel %vm237, %v573, -inf
    %665 = vmax.xlane.f32.xlu0 %v664
    %v666 = vpop.xlane.xlu0 %665
    %v667 = vsel %vm237, %v576, -inf
    %668 = vmax.xlane.f32.xlu0 %v667
    %v669 = vpop.xlane.xlu0 %668
    %v670 = vsel %vm237, %v622, -inf
    %671 = vmax.xlane.f32.xlu0 %v670
    %v672 = vpop.xlane.xlu0 %671
    %v673 = vsel %vm237, %v625, -inf
    %674 = vmax.xlane.f32.xlu0 %v673
    %v675 = vpop.xlane.xlu0 %674
    %v676 = vsub.f32 %v279, %v630
    %v677 = vsub.f32 %v282, %v633
    %v678 = vsub.f32 %v328, %v636
    %v679 = vsub.f32 %v331, %v639
    %v680 = vsub.f32 %v377, %v642
    %v681 = vsub.f32 %v380, %v645
    %v682 = vsub.f32 %v426, %v648
    %v683 = vsub.f32 %v429, %v651
    %v684 = vsub.f32 %v475, %v654
    %v685 = vsub.f32 %v478, %v657
    %v686 = vsub.f32 %v524, %v660
    %v687 = vsub.f32 %v527, %v663
    %v688 = vsub.f32 %v573, %v666
    %v689 = vsub.f32 %v576, %v669
    %v690 = vsub.f32 %v622, %v672
    %v691 = vsub.f32 %v625, %v675
    %v692 = vmul.f32 %v676, 1.442695
    %v693 = vpow.pop %v692
    %v694 = vmul.f32 %v677, 1.442695
    %v695 = vpow.pop %v694
    %v696 = vmul.f32 %v678, 1.442695
    %v697 = vpow.pop %v696
    %v698 = vmul.f32 %v679, 1.442695
    %v699 = vpow.pop %v698
    %v700 = vmul.f32 %v680, 1.442695
    %v701 = vpow.pop %v700
    %v702 = vmul.f32 %v681, 1.442695
    %v703 = vpow.pop %v702
    %v704 = vmul.f32 %v682, 1.442695
    %v705 = vpow.pop %v704
    %v706 = vmul.f32 %v683, 1.442695
    %v707 = vpow.pop %v706
    %v708 = vmul.f32 %v684, 1.442695
    %v709 = vpow.pop %v708
    %v710 = vmul.f32 %v685, 1.442695
    %v711 = vpow.pop %v710
    %v712 = vmul.f32 %v686, 1.442695
    %v713 = vpow.pop %v712
    %v714 = vmul.f32 %v687, 1.442695
    %v715 = vpow.pop %v714
    %v716 = vmul.f32 %v688, 1.442695
    %v717 = vpow.pop %v716
    %v718 = vmul.f32 %v689, 1.442695
    %v719 = vpow.pop %v718
    %v720 = vmul.f32 %v690, 1.442695
    %v721 = vpow.pop %v720
    %v722 = vmul.f32 %v691, 1.442695
    %v723 = vpow.pop %v722
    %v724 = vsel %vm237, %v693, 0.0
    %725 = vadd.xlane.f32.xlu0 %v724
    %v726 = vpop.xlane.xlu0 %725
    %v727 = vsel %vm237, %v695, 0.0
    %728 = vadd.xlane.f32.xlu0 %v727
    %v729 = vpop.xlane.xlu0 %728
    %v730 = vsel %vm237, %v697, 0.0
    %731 = vadd.xlane.f32.xlu0 %v730
    %v732 = vpop.xlane.xlu0 %731
    %v733 = vsel %vm237, %v699, 0.0
    %734 = vadd.xlane.f32.xlu0 %v733
    %v735 = vpop.xlane.xlu0 %734
    %v736 = vsel %vm237, %v701, 0.0
    %737 = vadd.xlane.f32.xlu0 %v736
    %v738 = vpop.xlane.xlu0 %737
    %v739 = vsel %vm237, %v703, 0.0
    %740 = vadd.xlane.f32.xlu0 %v739
    %v741 = vpop.xlane.xlu0 %740
    %v742 = vsel %vm237, %v705, 0.0
    %743 = vadd.xlane.f32.xlu0 %v742
    %v744 = vpop.xlane.xlu0 %743
    %v745 = vsel %vm237, %v707, 0.0
    %746 = vadd.xlane.f32.xlu0 %v745
    %v747 = vpop.xlane.xlu0 %746
    %v748 = vsel %vm237, %v709, 0.0
    %749 = vadd.xlane.f32.xlu0 %v748
    %v750 = vpop.xlane.xlu0 %749
    %v751 = vsel %vm237, %v711, 0.0
    %752 = vadd.xlane.f32.xlu0 %v751
    %v753 = vpop.xlane.xlu0 %752
    %v754 = vsel %vm237, %v713, 0.0
    %755 = vadd.xlane.f32.xlu0 %v754
    %v756 = vpop.xlane.xlu0 %755
    %v757 = vsel %vm237, %v715, 0.0
    %758 = vadd.xlane.f32.xlu0 %v757
    %v759 = vpop.xlane.xlu0 %758
    %v760 = vsel %vm237, %v717, 0.0
    %761 = vadd.xlane.f32.xlu0 %v760
    %v762 = vpop.xlane.xlu0 %761
    %v763 = vsel %vm237, %v719, 0.0
    %764 = vadd.xlane.f32.xlu0 %v763
    %v765 = vpop.xlane.xlu0 %764
    %v766 = vsel %vm237, %v721, 0.0
    %767 = vadd.xlane.f32.xlu0 %v766
    %v768 = vpop.xlane.xlu0 %767
    %v769 = vsel %vm237, %v723, 0.0
    %770 = vadd.xlane.f32.xlu0 %v769
    %v771 = vpop.xlane.xlu0 %770
    %v772 = vrcp.pop %v726
    %v773 = vrcp.pop %v729
    %v774 = vrcp.pop %v732
    %v775 = vrcp.pop %v735
    %v776 = vrcp.pop %v738
    %v777 = vrcp.pop %v741
    %v778 = vrcp.pop %v744
    %v779 = vrcp.pop %v747
    %v780 = vrcp.pop %v750
    %v781 = vrcp.pop %v753
    %v782 = vrcp.pop %v756
    %v783 = vrcp.pop %v759
    %v784 = vrcp.pop %v762
    %v785 = vrcp.pop %v765
    %v786 = vrcp.pop %v768
    %v787 = vrcp.pop %v771
    %v788 = vmul.f32 %v693, %v772
    %v789 = vmul.f32 %v695, %v773
    %v790 = vmul.f32 %v697, %v774
    %v791 = vmul.f32 %v699, %v775
    %v792 = vmul.f32 %v701, %v776
    %v793 = vmul.f32 %v703, %v777
    %v794 = vmul.f32 %v705, %v778
    %v795 = vmul.f32 %v707, %v779
    %v796 = vmul.f32 %v709, %v780
    %v797 = vmul.f32 %v711, %v781
    %v798 = vmul.f32 %v713, %v782
    %v799 = vmul.f32 %v715, %v783
    %v800 = vmul.f32 %v717, %v784
    %v801 = vmul.f32 %v719, %v785
    %v802 = vmul.f32 %v721, %v786
    %v803 = vmul.f32 %v723, %v787
    %v804 = vpack.c.bf16 %v789, %v788
    %v805 = vpack.c.bf16 %v791, %v790
    %v806 = vpack.c.bf16 %v793, %v792
    %v807 = vpack.c.bf16 %v795, %v794
    %v808 = vpack.c.bf16 %v797, %v796
    %v809 = vpack.c.bf16 %v799, %v798
    %v810 = vpack.c.bf16 %v801, %v800
    %v811 = vpack.c.bf16 %v803, %v802
    %v813 = vsel %vm237, %v804, 0
    %815 = vmatprep.subr.bf16.mxu0 0
    %816 = vmatpush1.bf16.msra.mxu0 %v196
    %817 = vmatprep.subr.bf16.mxu0 0
    %818 = vmatpush1.bf16.msra.mxu0 0
    %819 = vmatprep.subr.bf16.mxu0 0
    %820 = vmatpush1.bf16.msra.mxu0 0
    %821 = vmatprep.subr.bf16.mxu0 0
    %822 = vmatpush1.bf16.msra.mxu0 0
    %823 = vmatprep.subr.bf16.mxu0 0
    %824 = vmatpush1.bf16.msra.mxu0 0
    %825 = vmatprep.subr.bf16.mxu0 0
    %826 = vmatpush1.bf16.msra.mxu0 0
    %827 = vmatprep.subr.bf16.mxu0 0
    %828 = vmatpush1.bf16.msra.mxu0 0
    %829 = vmatprep.subr.bf16.mxu0 0
    %830 = vmatpush1.bf16.msra.mxu0 0
    %831 = vmatprep.subr.bf16.mxu0 0
    %832 = vmatpush1.bf16.msra.mxu0 0
    %833 = vmatprep.subr.bf16.mxu0 0
    %834 = vmatpush1.bf16.msra.mxu0 0
    %835 = vmatprep.subr.bf16.mxu0 0
    %836 = vmatpush1.bf16.msra.mxu0 0
    %837 = vmatprep.subr.bf16.mxu0 0
    %838 = vmatpush1.bf16.msra.mxu0 0
    %839 = vmatprep.subr.bf16.mxu0 0
    %840 = vmatpush1.bf16.msra.mxu0 0
    %841 = vmatprep.subr.bf16.mxu0 0
    %842 = vmatpush1.bf16.msra.mxu0 0
    %843 = vmatprep.subr.bf16.mxu0 0
    %844 = vmatpush1.bf16.msra.mxu0 0
    %845 = vmatprep.subr.bf16.mxu0 0
    %846 = vmatpush1.bf16.msra.mxu0 0
    %847 = vmatprep.mubr.bf16.mxu0 0
    %848 = vmatmul.mubr.bf16.gmra.mrb[0].mxu0 %v813
    %v849 = vpop.f32.mrb[0].mxu0
    %v850 = vadd.f32 0.0, %v849
    %v851 = vpop.f32.mrb[0].mxu0
    %v852 = vpop.f32.mrb[0].mxu0
    %v853 = vadd.f32 0.0, %v852
    %v854 = vpop.f32.mrb[0].mxu0
    %855 = vdwg.mxu0
    %v857 = vsel %vm237, %v805, 0
    %859 = vmatprep.subr.bf16.mxu0 0
    %860 = vmatpush1.bf16.msra.mxu0 %v215
    %861 = vmatprep.subr.bf16.mxu0 0
    %862 = vmatpush1.bf16.msra.mxu0 0
    %863 = vmatprep.subr.bf16.mxu0 0
    %864 = vmatpush1.bf16.msra.mxu0 0
    %865 = vmatprep.subr.bf16.mxu0 0
    %866 = vmatpush1.bf16.msra.mxu0 0
    %867 = vmatprep.subr.bf16.mxu0 0
    %868 = vmatpush1.bf16.msra.mxu0 0
    %869 = vmatprep.subr.bf16.mxu0 0
    %870 = vmatpush1.bf16.msra.mxu0 0
    %871 = vmatprep.subr.bf16.mxu0 0
    %872 = vmatpush1.bf16.msra.mxu0 0
    %873 = vmatprep.subr.bf16.mxu0 0
    %874 = vmatpush1.bf16.msra.mxu0 0
    %875 = vmatprep.subr.bf16.mxu0 0
    %876 = vmatpush1.bf16.msra.mxu0 0
    %877 = vmatprep.subr.bf16.mxu0 0
    %878 = vmatpush1.bf16.msra.mxu0 0
    %879 = vmatprep.subr.bf16.mxu0 0
    %880 = vmatpush1.bf16.msra.mxu0 0
    %881 = vmatprep.subr.bf16.mxu0 0
    %882 = vmatpush1.bf16.msra.mxu0 0
    %883 = vmatprep.subr.bf16.mxu0 0
    %884 = vmatpush1.bf16.msra.mxu0 0
    %885 = vmatprep.subr.bf16.mxu0 0
    %886 = vmatpush1.bf16.msra.mxu0 0
    %887 = vmatprep.subr.bf16.mxu0 0
    %888 = vmatpush1.bf16.msra.mxu0 0
    %889 = vmatprep.subr.bf16.mxu0 0
    %890 = vmatpush1.bf16.msra.mxu0 0
    %891 = vmatprep.mubr.bf16.mxu0 0
    %892 = vmatmul.mubr.bf16.gmra.mrb[0].mxu0 %v857
    %v893 = vpop.f32.mrb[0].mxu0
    %v894 = vadd.f32 0.0, %v893
    %v895 = vpop.f32.mrb[0].mxu0
    %v896 = vpop.f32.mrb[0].mxu0
    %v897 = vadd.f32 0.0, %v896
    %v898 = vpop.f32.mrb[0].mxu0
    %899 = vdwg.mxu0
    %v901 = vsel %vm237, %v806, 0
    %903 = vmatprep.subr.bf16.mxu0 0
    %904 = vmatpush1.bf16.msra.mxu0 %v218
    %905 = vmatprep.subr.bf16.mxu0 0
    %906 = vmatpush1.bf16.msra.mxu0 0
    %907 = vmatprep.subr.bf16.mxu0 0
    %908 = vmatpush1.bf16.msra.mxu0 0
    %909 = vmatprep.subr.bf16.mxu0 0
    %910 = vmatpush1.bf16.msra.mxu0 0
    %911 = vmatprep.subr.bf16.mxu0 0
    %912 = vmatpush1.bf16.msra.mxu0 0
    %913 = vmatprep.subr.bf16.mxu0 0
    %914 = vmatpush1.bf16.msra.mxu0 0
    %915 = vmatprep.subr.bf16.mxu0 0
    %916 = vmatpush1.bf16.msra.mxu0 0
    %917 = vmatprep.subr.bf16.mxu0 0
    %918 = vmatpush1.bf16.msra.mxu0 0
    %919 = vmatprep.subr.bf16.mxu0 0
    %920 = vmatpush1.bf16.msra.mxu0 0
    %921 = vmatprep.subr.bf16.mxu0 0
    %922 = vmatpush1.bf16.msra.mxu0 0
    %923 = vmatprep.subr.bf16.mxu0 0
    %924 = vmatpush1.bf16.msra.mxu0 0
    %925 = vmatprep.subr.bf16.mxu0 0
    %926 = vmatpush1.bf16.msra.mxu0 0
    %927 = vmatprep.subr.bf16.mxu0 0
    %928 = vmatpush1.bf16.msra.mxu0 0
    %929 = vmatprep.subr.bf16.mxu0 0
    %930 = vmatpush1.bf16.msra.mxu0 0
    %931 = vmatprep.subr.bf16.mxu0 0
    %932 = vmatpush1.bf16.msra.mxu0 0
    %933 = vmatprep.subr.bf16.mxu0 0
    %934 = vmatpush1.bf16.msra.mxu0 0
    %935 = vmatprep.mubr.bf16.mxu0 0
    %936 = vmatmul.mubr.bf16.gmra.mrb[0].mxu0 %v901
    %v937 = vpop.f32.mrb[0].mxu0
    %v938 = vadd.f32 0.0, %v937
    %v939 = vpop.f32.mrb[0].mxu0
    %v940 = vpop.f32.mrb[0].mxu0
    %v941 = vadd.f32 0.0, %v940
    %v942 = vpop.f32.mrb[0].mxu0
    %943 = vdwg.mxu0
    %v945 = vsel %vm237, %v807, 0
    %947 = vmatprep.subr.bf16.mxu0 0
    %948 = vmatpush1.bf16.msra.mxu0 %v221
    %949 = vmatprep.subr.bf16.mxu0 0
    %950 = vmatpush1.bf16.msra.mxu0 0
    %951 = vmatprep.subr.bf16.mxu0 0
    %952 = vmatpush1.bf16.msra.mxu0 0
    %953 = vmatprep.subr.bf16.mxu0 0
    %954 = vmatpush1.bf16.msra.mxu0 0
    %955 = vmatprep.subr.bf16.mxu0 0
    %956 = vmatpush1.bf16.msra.mxu0 0
    %957 = vmatprep.subr.bf16.mxu0 0
    %958 = vmatpush1.bf16.msra.mxu0 0
    %959 = vmatprep.subr.bf16.mxu0 0
    %960 = vmatpush1.bf16.msra.mxu0 0
    %961 = vmatprep.subr.bf16.mxu0 0
    %962 = vmatpush1.bf16.msra.mxu0 0
    %963 = vmatprep.subr.bf16.mxu0 0
    %964 = vmatpush1.bf16.msra.mxu0 0
    %965 = vmatprep.subr.bf16.mxu0 0
    %966 = vmatpush1.bf16.msra.mxu0 0
    %967 = vmatprep.subr.bf16.mxu0 0
    %968 = vmatpush1.bf16.msra.mxu0 0
    %969 = vmatprep.subr.bf16.mxu0 0
    %970 = vmatpush1.bf16.msra.mxu0 0
    %971 = vmatprep.subr.bf16.mxu0 0
    %972 = vmatpush1.bf16.msra.mxu0 0
    %973 = vmatprep.subr.bf16.mxu0 0
    %974 = vmatpush1.bf16.msra.mxu0 0
    %975 = vmatprep.subr.bf16.mxu0 0
    %976 = vmatpush1.bf16.msra.mxu0 0
    %977 = vmatprep.subr.bf16.mxu0 0
    %978 = vmatpush1.bf16.msra.mxu0 0
    %979 = vmatprep.mubr.bf16.mxu0 0
    %980 = vmatmul.mubr.bf16.gmra.mrb[0].mxu0 %v945
    %v981 = vpop.f32.mrb[0].mxu0
    %v982 = vadd.f32 0.0, %v981
    %v983 = vpop.f32.mrb[0].mxu0
    %v984 = vpop.f32.mrb[0].mxu0
    %v985 = vadd.f32 0.0, %v984
    %v986 = vpop.f32.mrb[0].mxu0
    %987 = vdwg.mxu0
    %v989 = vsel %vm237, %v808, 0
    %991 = vmatprep.subr.bf16.mxu0 0
    %992 = vmatpush1.bf16.msra.mxu0 %v198
    %993 = vmatprep.subr.bf16.mxu0 0
    %994 = vmatpush1.bf16.msra.mxu0 0
    %995 = vmatprep.subr.bf16.mxu0 0
    %996 = vmatpush1.bf16.msra.mxu0 0
    %997 = vmatprep.subr.bf16.mxu0 0
    %998 = vmatpush1.bf16.msra.mxu0 0
    %999 = vmatprep.subr.bf16.mxu0 0
    %1000 = vmatpush1.bf16.msra.mxu0 0
    %1001 = vmatprep.subr.bf16.mxu0 0
    %1002 = vmatpush1.bf16.msra.mxu0 0
    %1003 = vmatprep.subr.bf16.mxu0 0
    %1004 = vmatpush1.bf16.msra.mxu0 0
    %1005 = vmatprep.subr.bf16.mxu0 0
    %1006 = vmatpush1.bf16.msra.mxu0 0
    %1007 = vmatprep.subr.bf16.mxu0 0
    %1008 = vmatpush1.bf16.msra.mxu0 0
    %1009 = vmatprep.subr.bf16.mxu0 0
    %1010 = vmatpush1.bf16.msra.mxu0 0
    %1011 = vmatprep.subr.bf16.mxu0 0
    %1012 = vmatpush1.bf16.msra.mxu0 0
    %1013 = vmatprep.subr.bf16.mxu0 0
    %1014 = vmatpush1.bf16.msra.mxu0 0
    %1015 = vmatprep.subr.bf16.mxu0 0
    %1016 = vmatpush1.bf16.msra.mxu0 0
    %1017 = vmatprep.subr.bf16.mxu0 0
    %1018 = vmatpush1.bf16.msra.mxu0 0
    %1019 = vmatprep.subr.bf16.mxu0 0
    %1020 = vmatpush1.bf16.msra.mxu0 0
    %1021 = vmatprep.subr.bf16.mxu0 0
    %1022 = vmatpush1.bf16.msra.mxu0 0
    %1023 = vmatprep.mubr.bf16.mxu0 0
    %1024 = vmatmul.mubr.bf16.gmra.mrb[0].mxu0 %v989
    %v1025 = vpop.f32.mrb[0].mxu0
    %v1026 = vadd.f32 0.0, %v1025
    %v1027 = vpop.f32.mrb[0].mxu0
    %v1028 = vpop.f32.mrb[0].mxu0
    %v1029 = vadd.f32 0.0, %v1028
    %v1030 = vpop.f32.mrb[0].mxu0
    %1031 = vdwg.mxu0
    %v1033 = vsel %vm237, %v809, 0
    %1035 = vmatprep.subr.bf16.mxu0 0
    %1036 = vmatpush1.bf16.msra.mxu0 %v225
    %1037 = vmatprep.subr.bf16.mxu0 0
    %1038 = vmatpush1.bf16.msra.mxu0 0
    %1039 = vmatprep.subr.bf16.mxu0 0
    %1040 = vmatpush1.bf16.msra.mxu0 0
    %1041 = vmatprep.subr.bf16.mxu0 0
    %1042 = vmatpush1.bf16.msra.mxu0 0
    %1043 = vmatprep.subr.bf16.mxu0 0
    %1044 = vmatpush1.bf16.msra.mxu0 0
    %1045 = vmatprep.subr.bf16.mxu0 0
    %1046 = vmatpush1.bf16.msra.mxu0 0
    %1047 = vmatprep.subr.bf16.mxu0 0
    %1048 = vmatpush1.bf16.msra.mxu0 0
    %1049 = vmatprep.subr.bf16.mxu0 0
    %1050 = vmatpush1.bf16.msra.mxu0 0
    %1051 = vmatprep.subr.bf16.mxu0 0
    %1052 = vmatpush1.bf16.msra.mxu0 0
    %1053 = vmatprep.subr.bf16.mxu0 0
    %1054 = vmatpush1.bf16.msra.mxu0 0
    %1055 = vmatprep.subr.bf16.mxu0 0
    %1056 = vmatpush1.bf16.msra.mxu0 0
    %1057 = vmatprep.subr.bf16.mxu0 0
    %1058 = vmatpush1.bf16.msra.mxu0 0
    %1059 = vmatprep.subr.bf16.mxu0 0
    %1060 = vmatpush1.bf16.msra.mxu0 0
    %1061 = vmatprep.subr.bf16.mxu0 0
    %1062 = vmatpush1.bf16.msra.mxu0 0
    %1063 = vmatprep.subr.bf16.mxu0 0
    %1064 = vmatpush1.bf16.msra.mxu0 0
    %1065 = vmatprep.subr.bf16.mxu0 0
    %1066 = vmatpush1.bf16.msra.mxu0 0
    %1067 = vmatprep.mubr.bf16.mxu0 0
    %1068 = vmatmul.mubr.bf16.gmra.mrb[0].mxu0 %v1033
    %v1069 = vpop.f32.mrb[0].mxu0
    %v1070 = vadd.f32 0.0, %v1069
    %v1071 = vpop.f32.mrb[0].mxu0
    %v1072 = vpop.f32.mrb[0].mxu0
    %v1073 = vadd.f32 0.0, %v1072
    %v1074 = vpop.f32.mrb[0].mxu0
    %1075 = vdwg.mxu0
    %v1077 = vsel %vm237, %v810, 0
    %1079 = vmatprep.subr.bf16.mxu0 0
    %1080 = vmatpush1.bf16.msra.mxu0 %v228
    %1081 = vmatprep.subr.bf16.mxu0 0
    %1082 = vmatpush1.bf16.msra.mxu0 0
    %1083 = vmatprep.subr.bf16.mxu0 0
    %1084 = vmatpush1.bf16.msra.mxu0 0
    %1085 = vmatprep.subr.bf16.mxu0 0
    %1086 = vmatpush1.bf16.msra.mxu0 0
    %1087 = vmatprep.subr.bf16.mxu0 0
    %1088 = vmatpush1.bf16.msra.mxu0 0
    %1089 = vmatprep.subr.bf16.mxu0 0
    %1090 = vmatpush1.bf16.msra.mxu0 0
    %1091 = vmatprep.subr.bf16.mxu0 0
    %1092 = vmatpush1.bf16.msra.mxu0 0
    %1093 = vmatprep.subr.bf16.mxu0 0
    %1094 = vmatpush1.bf16.msra.mxu0 0
    %1095 = vmatprep.subr.bf16.mxu0 0
    %1096 = vmatpush1.bf16.msra.mxu0 0
    %1097 = vmatprep.subr.bf16.mxu0 0
    %1098 = vmatpush1.bf16.msra.mxu0 0
    %1099 = vmatprep.subr.bf16.mxu0 0
    %1100 = vmatpush1.bf16.msra.mxu0 0
    %1101 = vmatprep.subr.bf16.mxu0 0
    %1102 = vmatpush1.bf16.msra.mxu0 0
    %1103 = vmatprep.subr.bf16.mxu0 0
    %1104 = vmatpush1.bf16.msra.mxu0 0
    %1105 = vmatprep.subr.bf16.mxu0 0
    %1106 = vmatpush1.bf16.msra.mxu0 0
    %1107 = vmatprep.subr.bf16.mxu0 0
    %1108 = vmatpush1.bf16.msra.mxu0 0
    %1109 = vmatprep.subr.bf16.mxu0 0
    %1110 = vmatpush1.bf16.msra.mxu0 0
    %1111 = vmatprep.mubr.bf16.mxu0 0
    %1112 = vmatmul.mubr.bf16.gmra.mrb[0].mxu0 %v1077
    %v1113 = vpop.f32.mrb[0].mxu0
    %v1114 = vadd.f32 0.0, %v1113
    %v1115 = vpop.f32.mrb[0].mxu0
    %v1116 = vpop.f32.mrb[0].mxu0
    %v1117 = vadd.f32 0.0, %v1116
    %v1118 = vpop.f32.mrb[0].mxu0
    %1119 = vdwg.mxu0
    %v1121 = vsel %vm237, %v811, 0
    %1123 = vmatprep.subr.bf16.mxu0 0
    %1124 = vmatpush1.bf16.msra.mxu0 %v231
    %1125 = vmatprep.subr.bf16.mxu0 0
    %1126 = vmatpush1.bf16.msra.mxu0 0
    %1127 = vmatprep.subr.bf16.mxu0 0
    %1128 = vmatpush1.bf16.msra.mxu0 0
    %1129 = vmatprep.subr.bf16.mxu0 0
    %1130 = vmatpush1.bf16.msra.mxu0 0
    %1131 = vmatprep.subr.bf16.mxu0 0
    %1132 = vmatpush1.bf16.msra.mxu0 0
    %1133 = vmatprep.subr.bf16.mxu0 0
    %1134 = vmatpush1.bf16.msra.mxu0 0
    %1135 = vmatprep.subr.bf16.mxu0 0
    %1136 = vmatpush1.bf16.msra.mxu0 0
    %1137 = vmatprep.subr.bf16.mxu0 0
    %1138 = vmatpush1.bf16.msra.mxu0 0
    %1139 = vmatprep.subr.bf16.mxu0 0
    %1140 = vmatpush1.bf16.msra.mxu0 0
    %1141 = vmatprep.subr.bf16.mxu0 0
    %1142 = vmatpush1.bf16.msra.mxu0 0
    %1143 = vmatprep.subr.bf16.mxu0 0
    %1144 = vmatpush1.bf16.msra.mxu0 0
    %1145 = vmatprep.subr.bf16.mxu0 0
    %1146 = vmatpush1.bf16.msra.mxu0 0
    %1147 = vmatprep.subr.bf16.mxu0 0
    %1148 = vmatpush1.bf16.msra.mxu0 0
    %1149 = vmatprep.subr.bf16.mxu0 0
    %1150 = vmatpush1.bf16.msra.mxu0 0
    %1151 = vmatprep.subr.bf16.mxu0 0
    %1152 = vmatpush1.bf16.msra.mxu0 0
    %1153 = vmatprep.subr.bf16.mxu0 0
    %1154 = vmatpush1.bf16.msra.mxu0 0
    %1155 = vmatprep.mubr.bf16.mxu0 0
    %1156 = vmatmul.mubr.bf16.gmra.mrb[0].mxu0 %v1121
    %v1157 = vpop.f32.mrb[0].mxu0
    %v1158 = vadd.f32 0.0, %v1157
    %v1159 = vpop.f32.mrb[0].mxu0
    %v1160 = vpop.f32.mrb[0].mxu0
    %v1161 = vadd.f32 0.0, %v1160
    %v1162 = vpop.f32.mrb[0].mxu0
    %1163 = vdwg.mxu0
    %v1164 = vpack.c.bf16 %v853, %v850
    %v1165 = vpack.c.bf16 %v897, %v894
    %v1166 = vpack.c.bf16 %v941, %v938
    %v1167 = vpack.c.bf16 %v985, %v982
    %v1168 = vpack.c.bf16 %v1029, %v1026
    %v1169 = vpack.c.bf16 %v1073, %v1070
    %v1170 = vpack.c.bf16 %v1117, %v1114
    %v1171 = vpack.c.bf16 %v1161, %v1158
    %1173 = vrot.lane.b32.xlu0 %v1165, 16
    %v1174 = vpop.permute.xlu0 %1173
    %1176 = vrot.lane.b32.xlu0 %v1166, 32
    %v1177 = vpop.permute.xlu0 %1176
    %1179 = vrot.lane.b32.xlu0 %v1167, 48
    %v1180 = vpop.permute.xlu0 %1179
    %v1183 = vsel %vm237, %v1164, %v1174
    %vm1184 = vcmask 261120
    %v1186 = vsel %vm1184, %v1183, %v1177
    %vm1187 = vcmask 392192
    %v1189 = vsel %vm1187, %v1186, %v1180
    %1191 = vrot.lane.b32.xlu0 %v1169, 16
    %v1192 = vpop.permute.xlu0 %1191
    %1194 = vrot.lane.b32.xlu0 %v1170, 32
    %v1195 = vpop.permute.xlu0 %1194
    %1197 = vrot.lane.b32.xlu0 %v1171, 48
    %v1198 = vpop.permute.xlu0 %1197
    %v1201 = vsel %vm237, %v1168, %v1192
    %v1203 = vsel %vm1184, %v1201, %v1195
    %v1205 = vsel %vm1187, %v1203, %v1198
    %v1206 = vld [vmem:[%s2] sm:$0xf]
    %v1207 = vld [vmem:[%s2 + $0x4] sm:$0xf]
    %v1208 = vld [vmem:[%s2 + $0x8] sm:$0xf]
    %v1209 = vld [vmem:[%s2 + $0xc] sm:$0xf]
    %v1210 = vld [vmem:[%s2 + $0x10] sm:$0xf]
    %v1211 = vld [vmem:[%s2 + $0x14] sm:$0xf]
    %v1212 = vld [vmem:[%s2 + $0x18] sm:$0xf]
    %v1213 = vld [vmem:[%s2 + $0x1c] sm:$0xf]
    %v1214 = vld [vmem:[#allocation2] sm:$0x1]
    %v1216 = vlaneseq
    %v1217 = vshrl.u32 %v1216, 7
    %v1218 = vsub.s32 0, %v1217
    %v1219 = vrot.slane %v1214, %v1218
    %v1229 = vunpack.c.l.b16 %v1206
    %v1230 = vunpack.c.l.b16 %v1207
    %v1231 = vunpack.c.l.b16 %v1208
    %v1232 = vunpack.c.l.b16 %v1209
    %v1233 = vunpack.c.l.b16 %v1210
    %v1234 = vunpack.c.l.b16 %v1211
    %v1235 = vunpack.c.l.b16 %v1212
    %v1236 = vunpack.c.l.b16 %v1213
    %v1237 = vpack.c.b16 %v1230, %v1229
    %v1238 = vpack.c.b16 %v1232, %v1231
    %v1239 = vpack.c.b16 %v1234, %v1233
    %v1240 = vpack.c.b16 %v1236, %v1235
    %v1245 = vsel %vm135, %v1189, 0
    %v1247 = vsel %vm135, %v1205, 0
    %1249 = vmatprep.subr.bf16.mxu0 0
    %1250 = vmatpush1.bf16.msra.mxu0 %v1237
    %1251 = vmatprep.subr.bf16.mxu0 0
    %1252 = vmatpush1.bf16.msra.mxu0 %v1238
    %1253 = vmatprep.subr.bf16.mxu0 0
    %1254 = vmatpush1.bf16.msra.mxu0 %v1239
    %1255 = vmatprep.subr.bf16.mxu0 0
    %1256 = vmatpush1.bf16.msra.mxu0 %v1240
    %1257 = vmatprep.subr.bf16.mxu0 0
    %1258 = vmatpush1.bf16.msra.mxu0 0
    %1259 = vmatprep.subr.bf16.mxu0 0
    %1260 = vmatpush1.bf16.msra.mxu0 0
    %1261 = vmatprep.subr.bf16.mxu0 0
    %1262 = vmatpush1.bf16.msra.mxu0 0
    %1263 = vmatprep.subr.bf16.mxu0 0
    %1264 = vmatpush1.bf16.msra.mxu0 0
    %1265 = vmatprep.subr.bf16.mxu0 0
    %1266 = vmatpush1.bf16.msra.mxu0 0
    %1267 = vmatprep.subr.bf16.mxu0 0
    %1268 = vmatpush1.bf16.msra.mxu0 0
    %1269 = vmatprep.subr.bf16.mxu0 0
    %1270 = vmatpush1.bf16.msra.mxu0 0
    %1271 = vmatprep.subr.bf16.mxu0 0
    %1272 = vmatpush1.bf16.msra.mxu0 0
    %1273 = vmatprep.subr.bf16.mxu0 0
    %1274 = vmatpush1.bf16.msra.mxu0 0
    %1275 = vmatprep.subr.bf16.mxu0 0
    %1276 = vmatpush1.bf16.msra.mxu0 0
    %1277 = vmatprep.subr.bf16.mxu0 0
    %1278 = vmatpush1.bf16.msra.mxu0 0
    %1279 = vmatprep.subr.bf16.mxu0 0
    %1280 = vmatpush1.bf16.msra.mxu0 0
    %1281 = vmatprep.mubr.bf16.mxu0 0
    %1282 = vmatmul.mubr.bf16.gmra.mrb[0].mxu0 %v1245
    %v1283 = vpop.f32.mrb[0].mxu0
    %v1284 = vadd.f32 %v1219, %v1283
    %v1285 = vpop.f32.mrb[0].mxu0
    %v1286 = vpop.f32.mrb[0].mxu0
    %v1287 = vadd.f32 %v1219, %v1286
    %v1288 = vpop.f32.mrb[0].mxu0
    %1289 = vmatprep.mubr.bf16.mxu0 0
    %1290 = vmatmul.mubr.bf16.gmra.mrb[0].mxu0 %v1247
    %v1291 = vpop.f32.mrb[0].mxu0
    %v1292 = vadd.f32 %v1219, %v1291
    %v1293 = vpop.f32.mrb[0].mxu0
    %v1294 = vpop.f32.mrb[0].mxu0
    %v1295 = vadd.f32 %v1219, %v1294
    %v1296 = vpop.f32.mrb[0].mxu0
    %1297 = vdwg.mxu0
    %v1298 = vadd.f32 %v1284, %v81
    %v1299 = vadd.f32 %v1287, %v82
    %v1300 = vadd.f32 %v1292, %v83
    %v1301 = vadd.f32 %v1295, %v84
    %v1302 = vld [vmem:[#allocation5] sm:$0x1]
    %v1303 = vld [vmem:[#allocation7] sm:$0x1]
    %v1304 = vsel %vm135, %v1298, 0.0
    %1305 = vadd.xlane.f32.xlu0 %v1304
    %v1306 = vpop.xlane.xlu0 %1305
    %v1307 = vsel %vm135, %v1299, 0.0
    %1308 = vadd.xlane.f32.xlu0 %v1307
    %v1309 = vpop.xlane.xlu0 %1308
    %v1310 = vsel %vm135, %v1300, 0.0
    %1311 = vadd.xlane.f32.xlu0 %v1310
    %v1312 = vpop.xlane.xlu0 %1311
    %v1313 = vsel %vm135, %v1301, 0.0
    %1314 = vadd.xlane.f32.xlu0 %v1313
    %v1315 = vpop.xlane.xlu0 %1314
    %v1316 = vrcp.pop 64.0
    %v1317 = vmul.f32 %v1306, %v1316
    %v1318 = vmul.f32 %v1309, %v1316
    %v1319 = vmul.f32 %v1312, %v1316
    %v1320 = vmul.f32 %v1315, %v1316
    %v1321 = vsub.f32 %v1298, %v1317
    %v1322 = vsub.f32 %v1299, %v1318
    %v1323 = vsub.f32 %v1300, %v1319
    %v1324 = vsub.f32 %v1301, %v1320
    %v1325 = vmul.f32 %v1321, %v1321
    %v1326 = vmul.f32 %v1322, %v1322
    %v1327 = vmul.f32 %v1323, %v1323
    %v1328 = vmul.f32 %v1324, %v1324
    %v1329 = vsel %vm135, %v1325, 0.0
    %1330 = vadd.xlane.f32.xlu0 %v1329
    %v1331 = vpop.xlane.xlu0 %1330
    %v1332 = vsel %vm135, %v1326, 0.0
    %1333 = vadd.xlane.f32.xlu0 %v1332
    %v1334 = vpop.xlane.xlu0 %1333
    %v1335 = vsel %vm135, %v1327, 0.0
    %1336 = vadd.xlane.f32.xlu0 %v1335
    %v1337 = vpop.xlane.xlu0 %1336
    %v1338 = vsel %vm135, %v1328, 0.0
    %1339 = vadd.xlane.f32.xlu0 %v1338
    %v1340 = vpop.xlane.xlu0 %1339
    %v1341 = vmul.f32 %v1331, %v1316
    %v1342 = vmul.f32 %v1334, %v1316
    %v1343 = vmul.f32 %v1337, %v1316
    %v1344 = vmul.f32 %v1340, %v1316
    %v1345 = vadd.f32 %v1341, 1e-05
    %v1346 = vadd.f32 %v1342, 1e-05
    %v1347 = vadd.f32 %v1343, 1e-05
    %v1348 = vadd.f32 %v1344, 1e-05
    %v1349 = vrsqrt.pop %v1345
    %v1350 = vrsqrt.pop %v1346
    %v1351 = vrsqrt.pop %v1347
    %v1352 = vrsqrt.pop %v1348
    %v1353 = vmul.f32 %v1321, %v1349
    %v1354 = vmul.f32 %v1322, %v1350
    %v1355 = vmul.f32 %v1323, %v1351
    %v1356 = vmul.f32 %v1324, %v1352
    %v1358 = vlaneseq
    %v1359 = vshrl.u32 %v1358, 7
    %v1360 = vsub.s32 0, %v1359
    %v1361 = vrot.slane %v1302, %v1360
    %v1363 = vmul.f32 %v1353, %v1361
    %v1364 = vmul.f32 %v1354, %v1361
    %v1365 = vmul.f32 %v1355, %v1361
    %v1366 = vmul.f32 %v1356, %v1361
    %v1368 = vlaneseq
    %v1369 = vshrl.u32 %v1368, 7
    %v1370 = vsub.s32 0, %v1369
    %v1371 = vrot.slane %v1303, %v1370
    %v1373 = vadd.f32 %v1363, %v1371
    %v1374 = vadd.f32 %v1364, %v1371
    %v1375 = vadd.f32 %v1365, %v1371
    %v1376 = vadd.f32 %v1366, %v1371
    %v1377 = vpack.c.bf16 %v1374, %v1373
    %v1378 = vpack.c.bf16 %v1376, %v1375
    %v1379 = vld [vmem:[%s6] sm:$0xff]
    %v1380 = vld [vmem:[%s6 + $0x8] sm:$0xff]
    %v1381 = vld [vmem:[%s6 + $0x10] sm:$0xff]
    %v1382 = vld [vmem:[%s6 + $0x18] sm:$0xff]
    %v1383 = vld [vmem:[%s6 + $0x20] sm:$0xff]
    %v1384 = vld [vmem:[%s6 + $0x28] sm:$0xff]
    %v1385 = vld [vmem:[%s6 + $0x30] sm:$0xff]
    %v1386 = vld [vmem:[%s6 + $0x38] sm:$0xff]
    %v1387 = vld [vmem:[%s7] sm:$0x3]
    %v1389 = vlaneseq
    %v1390 = vshrl.u32 %v1389, 7
    %v1391 = vsub.s32 0, %v1390
    %v1392 = vrot.slane %v1387, %v1391
    %v1393 = vlaneseq
    %v1394 = vshrl.u32 %v1393, 7
    %v1395 = vsub.s32 1, %v1394
    %v1396 = vrot.slane %v1387, %v1395
    %v1407 = vunpack.c.l.b16 %v1379
    %v1408 = vunpack.c.h.b16 %v1379
    %v1409 = vunpack.c.l.b16 %v1380
    %v1410 = vunpack.c.h.b16 %v1380
    %v1411 = vunpack.c.l.b16 %v1381
    %v1412 = vunpack.c.h.b16 %v1381
    %v1413 = vunpack.c.l.b16 %v1382
    %v1414 = vunpack.c.h.b16 %v1382
    %v1415 = vunpack.c.l.b16 %v1383
    %v1416 = vunpack.c.h.b16 %v1383
    %v1417 = vunpack.c.l.b16 %v1384
    %v1418 = vunpack.c.h.b16 %v1384
    %v1419 = vunpack.c.l.b16 %v1385
    %v1420 = vunpack.c.h.b16 %v1385
    %v1421 = vunpack.c.l.b16 %v1386
    %v1422 = vunpack.c.h.b16 %v1386
    %v1423 = vpack.c.b16 %v1409, %v1407
    %v1424 = vpack.c.b16 %v1410, %v1408
    %v1425 = vpack.c.b16 %v1413, %v1411
    %v1426 = vpack.c.b16 %v1414, %v1412
    %v1427 = vpack.c.b16 %v1417, %v1415
    %v1428 = vpack.c.b16 %v1418, %v1416
    %v1429 = vpack.c.b16 %v1421, %v1419
    %v1430 = vpack.c.b16 %v1422, %v1420
    %v1440 = vsel %vm135, %v1377, 0
    %v1443 = vsel %vm135, %v1378, 0
    %1445 = vmatprep.subr.bf16.mxu0 %v1424
    %1446 = vmatpush1.bf16.msra.mxu0 %v1423
    %1447 = vmatprep.subr.bf16.mxu0 %v1426
    %1448 = vmatpush1.bf16.msra.mxu0 %v1425
    %1449 = vmatprep.subr.bf16.mxu0 %v1428
    %1450 = vmatpush1.bf16.msra.mxu0 %v1427
    %1451 = vmatprep.subr.bf16.mxu0 %v1430
    %1452 = vmatpush1.bf16.msra.mxu0 %v1429
    %1453 = vmatprep.subr.bf16.mxu0 0
    %1454 = vmatpush1.bf16.msra.mxu0 0
    %1455 = vmatprep.subr.bf16.mxu0 0
    %1456 = vmatpush1.bf16.msra.mxu0 0
    %1457 = vmatprep.subr.bf16.mxu0 0
    %1458 = vmatpush1.bf16.msra.mxu0 0
    %1459 = vmatprep.subr.bf16.mxu0 0
    %1460 = vmatpush1.bf16.msra.mxu0 0
    %1461 = vmatprep.subr.bf16.mxu0 0
    %1462 = vmatpush1.bf16.msra.mxu0 0
    %1463 = vmatprep.subr.bf16.mxu0 0
    %1464 = vmatpush1.bf16.msra.mxu0 0
    %1465 = vmatprep.subr.bf16.mxu0 0
    %1466 = vmatpush1.bf16.msra.mxu0 0
    %1467 = vmatprep.subr.bf16.mxu0 0
    %1468 = vmatpush1.bf16.msra.mxu0 0
    %1469 = vmatprep.subr.bf16.mxu0 0
    %1470 = vmatpush1.bf16.msra.mxu0 0
    %1471 = vmatprep.subr.bf16.mxu0 0
    %1472 = vmatpush1.bf16.msra.mxu0 0
    %1473 = vmatprep.subr.bf16.mxu0 0
    %1474 = vmatpush1.bf16.msra.mxu0 0
    %1475 = vmatprep.subr.bf16.mxu0 0
    %1476 = vmatpush1.bf16.msra.mxu0 0
    %1477 = vmatprep.mubr.bf16.mxu0 0
    %1478 = vmatmul.mubr.bf16.gmra.mrb[0].mxu0 %v1440
    %v1479 = vpop.f32.mrb[0].mxu0
    %v1480 = vadd.f32 %v1392, %v1479
    %v1481 = vpop.f32.mrb[0].mxu0
    %v1482 = vadd.f32 %v1396, %v1481
    %v1483 = vpop.f32.mrb[0].mxu0
    %v1484 = vadd.f32 %v1392, %v1483
    %v1485 = vpop.f32.mrb[0].mxu0
    %v1486 = vadd.f32 %v1396, %v1485
    %1487 = vmatprep.mubr.bf16.mxu0 0
    %1488 = vmatmul.mubr.bf16.gmra.mrb[0].mxu0 %v1443
    %v1489 = vpop.f32.mrb[0].mxu0
    %v1490 = vadd.f32 %v1392, %v1489
    %v1491 = vpop.f32.mrb[0].mxu0
    %v1492 = vadd.f32 %v1396, %v1491
    %v1493 = vpop.f32.mrb[0].mxu0
    %v1494 = vadd.f32 %v1392, %v1493
    %v1495 = vpop.f32.mrb[0].mxu0
    %v1496 = vadd.f32 %v1396, %v1495
    %1497 = vdwg.mxu0
    %vm1498 = vcmp.ge.f32.partialorder %v1480, 0.0
    %vm1499 = vcmp.ge.f32.partialorder %v1482, 0.0
    %vm1500 = vcmp.ge.f32.partialorder %v1484, 0.0
    %vm1501 = vcmp.ge.f32.partialorder %v1486, 0.0
    %vm1502 = vcmp.ge.f32.partialorder %v1490, 0.0
    %vm1503 = vcmp.ge.f32.partialorder %v1492, 0.0
    %vm1504 = vcmp.ge.f32.partialorder %v1494, 0.0
    %vm1505 = vcmp.ge.f32.partialorder %v1496, 0.0
    %v1506 = vmul.f32 %v1480, 0.01
    %v1507 = vmul.f32 %v1482, 0.01
    %v1508 = vmul.f32 %v1484, 0.01
    %v1509 = vmul.f32 %v1486, 0.01
    %v1510 = vmul.f32 %v1490, 0.01
    %v1511 = vmul.f32 %v1492, 0.01
    %v1512 = vmul.f32 %v1494, 0.01
    %v1513 = vmul.f32 %v1496, 0.01
    %v1514 = vsel %vm1498, %v1480, %v1506
    %v1515 = vsel %vm1499, %v1482, %v1507
    %v1516 = vsel %vm1500, %v1484, %v1508
    %v1517 = vsel %vm1501, %v1486, %v1509
    %v1518 = vsel %vm1502, %v1490, %v1510
    %v1519 = vsel %vm1503, %v1492, %v1511
    %v1520 = vsel %vm1504, %v1494, %v1512
    %v1521 = vsel %vm1505, %v1496, %v1513
    %v1522 = vpack.c.bf16 %v1516, %v1514
    %v1523 = vpack.c.bf16 %v1517, %v1515
    %v1524 = vpack.c.bf16 %v1520, %v1518
    %v1525 = vpack.c.bf16 %v1521, %v1519
    %v1526 = vld [vmem:[%s8] sm:$0xf]
    %v1527 = vld [vmem:[%s8 + $0x4] sm:$0xf]
    %v1528 = vld [vmem:[%s8 + $0x8] sm:$0xf]
    %v1529 = vld [vmem:[%s8 + $0xc] sm:$0xf]
    %v1530 = vld [vmem:[%s8 + $0x10] sm:$0xf]
    %v1531 = vld [vmem:[%s8 + $0x14] sm:$0xf]
    %v1532 = vld [vmem:[%s8 + $0x18] sm:$0xf]
    %v1533 = vld [vmem:[%s8 + $0x1c] sm:$0xf]
    %v1534 = vld [vmem:[%s8 + $0x20] sm:$0xf]
    %v1535 = vld [vmem:[%s8 + $0x24] sm:$0xf]
    %v1536 = vld [vmem:[%s8 + $0x28] sm:$0xf]
    %v1537 = vld [vmem:[%s8 + $0x2c] sm:$0xf]
    %v1538 = vld [vmem:[%s8 + $0x30] sm:$0xf]
    %v1539 = vld [vmem:[%s8 + $0x34] sm:$0xf]
    %v1540 = vld [vmem:[%s8 + $0x38] sm:$0xf]
    %v1541 = vld [vmem:[%s8 + $0x3c] sm:$0xf]
    %v1542 = vld [vmem:[%s8 + $0x40] sm:$0xf]
    %v1543 = vld [vmem:[%s8 + $0x44] sm:$0xf]
    %v1544 = vld [vmem:[%s8 + $0x48] sm:$0xf]
    %v1545 = vld [vmem:[%s8 + $0x4c] sm:$0xf]
    %v1546 = vld [vmem:[%s8 + $0x50] sm:$0xf]
    %v1547 = vld [vmem:[%s8 + $0x54] sm:$0xf]
    %v1548 = vld [vmem:[%s8 + $0x58] sm:$0xf]
    %v1549 = vld [vmem:[%s8 + $0x5c] sm:$0xf]
    %v1550 = vld [vmem:[%s8 + $0x60] sm:$0xf]
    %v1551 = vld [vmem:[%s8 + $0x64] sm:$0xf]
    %v1552 = vld [vmem:[%s8 + $0x68] sm:$0xf]
    %v1553 = vld [vmem:[%s8 + $0x6c] sm:$0xf]
    %v1554 = vld [vmem:[%s8 + $0x70] sm:$0xf]
    %v1555 = vld [vmem:[%s8 + $0x74] sm:$0xf]
    %v1556 = vld [vmem:[%s8 + $0x78] sm:$0xf]
    %v1557 = vld [vmem:[%s8 + $0x7c] sm:$0xf]
    %v1558 = vld [vmem:[%s9] sm:$0x1]
    %v1560 = vlaneseq
    %v1561 = vshrl.u32 %v1560, 7
    %v1562 = vsub.s32 0, %v1561
    %v1563 = vrot.slane %v1558, %v1562
    %v1597 = vunpack.c.l.b16 %v1526
    %v1598 = vunpack.c.l.b16 %v1527
    %v1599 = vunpack.c.l.b16 %v1528
    %v1600 = vunpack.c.l.b16 %v1529
    %v1601 = vunpack.c.l.b16 %v1530
    %v1602 = vunpack.c.l.b16 %v1531
    %v1603 = vunpack.c.l.b16 %v1532
    %v1604 = vunpack.c.l.b16 %v1533
    %v1605 = vunpack.c.l.b16 %v1534
    %v1606 = vunpack.c.l.b16 %v1535
    %v1607 = vunpack.c.l.b16 %v1536
    %v1608 = vunpack.c.l.b16 %v1537
    %v1609 = vunpack.c.l.b16 %v1538
    %v1610 = vunpack.c.l.b16 %v1539
    %v1611 = vunpack.c.l.b16 %v1540
    %v1612 = vunpack.c.l.b16 %v1541
    %v1613 = vunpack.c.l.b16 %v1542
    %v1614 = vunpack.c.l.b16 %v1543
    %v1615 = vunpack.c.l.b16 %v1544
    %v1616 = vunpack.c.l.b16 %v1545
    %v1617 = vunpack.c.l.b16 %v1546
    %v1618 = vunpack.c.l.b16 %v1547
    %v1619 = vunpack.c.l.b16 %v1548
    %v1620 = vunpack.c.l.b16 %v1549
    %v1621 = vunpack.c.l.b16 %v1550
    %v1622 = vunpack.c.l.b16 %v1551
    %v1623 = vunpack.c.l.b16 %v1552
    %v1624 = vunpack.c.l.b16 %v1553
    %v1625 = vunpack.c.l.b16 %v1554
    %v1626 = vunpack.c.l.b16 %v1555
    %v1627 = vunpack.c.l.b16 %v1556
    %v1628 = vunpack.c.l.b16 %v1557
    %v1629 = vpack.c.b16 %v1598, %v1597
    %v1630 = vpack.c.b16 %v1600, %v1599
    %v1631 = vpack.c.b16 %v1602, %v1601
    %v1632 = vpack.c.b16 %v1604, %v1603
    %v1633 = vpack.c.b16 %v1606, %v1605
    %v1634 = vpack.c.b16 %v1608, %v1607
    %v1635 = vpack.c.b16 %v1610, %v1609
    %v1636 = vpack.c.b16 %v1612, %v1611
    %v1637 = vpack.c.b16 %v1614, %v1613
    %v1638 = vpack.c.b16 %v1616, %v1615
    %v1639 = vpack.c.b16 %v1618, %v1617
    %v1640 = vpack.c.b16 %v1620, %v1619
    %v1641 = vpack.c.b16 %v1622, %v1621
    %v1642 = vpack.c.b16 %v1624, %v1623
    %v1643 = vpack.c.b16 %v1626, %v1625
    %v1644 = vpack.c.b16 %v1628, %v1627
    %1661 = vmatprep.subr.bf16.mxu0 0
    %1662 = vmatpush1.bf16.msra.mxu0 %v1629
    %1663 = vmatprep.subr.bf16.mxu0 0
    %1664 = vmatpush1.bf16.msra.mxu0 %v1630
    %1665 = vmatprep.subr.bf16.mxu0 0
    %1666 = vmatpush1.bf16.msra.mxu0 %v1631
    %1667 = vmatprep.subr.bf16.mxu0 0
    %1668 = vmatpush1.bf16.msra.mxu0 %v1632
    %1669 = vmatprep.subr.bf16.mxu0 0
    %1670 = vmatpush1.bf16.msra.mxu0 %v1633
    %1671 = vmatprep.subr.bf16.mxu0 0
    %1672 = vmatpush1.bf16.msra.mxu0 %v1634
    %1673 = vmatprep.subr.bf16.mxu0 0
    %1674 = vmatpush1.bf16.msra.mxu0 %v1635
    %1675 = vmatprep.subr.bf16.mxu0 0
    %1676 = vmatpush1.bf16.msra.mxu0 %v1636
    %1677 = vmatprep.subr.bf16.mxu0 0
    %1678 = vmatpush1.bf16.msra.mxu0 %v1637
    %1679 = vmatprep.subr.bf16.mxu0 0
    %1680 = vmatpush1.bf16.msra.mxu0 %v1638
    %1681 = vmatprep.subr.bf16.mxu0 0
    %1682 = vmatpush1.bf16.msra.mxu0 %v1639
    %1683 = vmatprep.subr.bf16.mxu0 0
    %1684 = vmatpush1.bf16.msra.mxu0 %v1640
    %1685 = vmatprep.subr.bf16.mxu0 0
    %1686 = vmatpush1.bf16.msra.mxu0 %v1641
    %1687 = vmatprep.subr.bf16.mxu0 0
    %1688 = vmatpush1.bf16.msra.mxu0 %v1642
    %1689 = vmatprep.subr.bf16.mxu0 0
    %1690 = vmatpush1.bf16.msra.mxu0 %v1643
    %1691 = vmatprep.subr.bf16.mxu0 0
    %1692 = vmatpush1.bf16.msra.mxu0 %v1644
    %1693 = vmatprep.mubr.bf16.mxu0 %v1523
    %1694 = vmatmul.mubr.bf16.gmra.mrb[0].mxu0 %v1522
    %v1695 = vpop.f32.mrb[0].mxu0
    %v1696 = vadd.f32 %v1563, %v1695
    %v1697 = vpop.f32.mrb[0].mxu0
    %v1698 = vpop.f32.mrb[0].mxu0
    %v1699 = vadd.f32 %v1563, %v1698
    %v1700 = vpop.f32.mrb[0].mxu0
    %1701 = vmatprep.mubr.bf16.mxu0 %v1525
    %1702 = vmatmul.mubr.bf16.gmra.mrb[0].mxu0 %v1524
    %v1703 = vpop.f32.mrb[0].mxu0
    %v1704 = vadd.f32 %v1563, %v1703
    %v1705 = vpop.f32.mrb[0].mxu0
    %v1706 = vpop.f32.mrb[0].mxu0
    %v1707 = vadd.f32 %v1563, %v1706
    %v1708 = vpop.f32.mrb[0].mxu0
    %1709 = vdwg.mxu0
    %v1710 = vadd.f32 %v1696, %v1373
    %v1711 = vadd.f32 %v1699, %v1374
    %v1712 = vadd.f32 %v1704, %v1375
    %v1713 = vadd.f32 %v1707, %v1376
    %v1714 = vld [vmem:[%s10] sm:$0x1]
    %v1715 = vld [vmem:[%s11] sm:$0x1]
    %v1716 = vsel %vm135, %v1710, 0.0
    %1717 = vadd.xlane.f32.xlu0 %v1716
    %v1718 = vpop.xlane.xlu0 %1717
    %v1719 = vsel %vm135, %v1711, 0.0
    %1720 = vadd.xlane.f32.xlu0 %v1719
    %v1721 = vpop.xlane.xlu0 %1720
    %v1722 = vsel %vm135, %v1712, 0.0
    %1723 = vadd.xlane.f32.xlu0 %v1722
    %v1724 = vpop.xlane.xlu0 %1723
    %v1725 = vsel %vm135, %v1713, 0.0
    %1726 = vadd.xlane.f32.xlu0 %v1725
    %v1727 = vpop.xlane.xlu0 %1726
    %v1728 = vmul.f32 %v1718, %v1316
    %v1729 = vmul.f32 %v1721, %v1316
    %v1730 = vmul.f32 %v1724, %v1316
    %v1731 = vmul.f32 %v1727, %v1316
    %v1732 = vsub.f32 %v1710, %v1728
    %v1733 = vsub.f32 %v1711, %v1729
    %v1734 = vsub.f32 %v1712, %v1730
    %v1735 = vsub.f32 %v1713, %v1731
    %v1736 = vmul.f32 %v1732, %v1732
    %v1737 = vmul.f32 %v1733, %v1733
    %v1738 = vmul.f32 %v1734, %v1734
    %v1739 = vmul.f32 %v1735, %v1735
    %v1740 = vsel %vm135, %v1736, 0.0
    %1741 = vadd.xlane.f32.xlu0 %v1740
    %v1742 = vpop.xlane.xlu0 %1741
    %v1743 = vsel %vm135, %v1737, 0.0
    %1744 = vadd.xlane.f32.xlu0 %v1743
    %v1745 = vpop.xlane.xlu0 %1744
    %v1746 = vsel %vm135, %v1738, 0.0
    %1747 = vadd.xlane.f32.xlu0 %v1746
    %v1748 = vpop.xlane.xlu0 %1747
    %v1749 = vsel %vm135, %v1739, 0.0
    %1750 = vadd.xlane.f32.xlu0 %v1749
    %v1751 = vpop.xlane.xlu0 %1750
    %v1752 = vmul.f32 %v1742, %v1316
    %v1753 = vmul.f32 %v1745, %v1316
    %v1754 = vmul.f32 %v1748, %v1316
    %v1755 = vmul.f32 %v1751, %v1316
    %v1756 = vadd.f32 %v1752, 1e-05
    %v1757 = vadd.f32 %v1753, 1e-05
    %v1758 = vadd.f32 %v1754, 1e-05
    %v1759 = vadd.f32 %v1755, 1e-05
    %v1760 = vrsqrt.pop %v1756
    %v1761 = vrsqrt.pop %v1757
    %v1762 = vrsqrt.pop %v1758
    %v1763 = vrsqrt.pop %v1759
    %v1764 = vmul.f32 %v1732, %v1760
    %v1765 = vmul.f32 %v1733, %v1761
    %v1766 = vmul.f32 %v1734, %v1762
    %v1767 = vmul.f32 %v1735, %v1763
    %v1769 = vlaneseq
    %v1770 = vshrl.u32 %v1769, 7
    %v1771 = vsub.s32 0, %v1770
    %v1772 = vrot.slane %v1714, %v1771
    %v1774 = vmul.f32 %v1764, %v1772
    %v1775 = vmul.f32 %v1765, %v1772
    %v1776 = vmul.f32 %v1766, %v1772
    %v1777 = vmul.f32 %v1767, %v1772
    %v1779 = vlaneseq
    %v1780 = vshrl.u32 %v1779, 7
    %v1781 = vsub.s32 0, %v1780
    %v1782 = vrot.slane %v1715, %v1781
    %v1784 = vadd.f32 %v1774, %v1782
    %v1785 = vadd.f32 %v1775, %v1782
    %v1786 = vadd.f32 %v1776, %v1782
    %v1787 = vadd.f32 %v1777, %v1782
    %1788 = vst.msk [vmem:[#allocation8] sm:$0xff] %vm135, %v1784
    %1789 = vst.msk [vmem:[#allocation8 + $0x8] sm:$0xff] %vm135, %v1785
    %1790 = vst.msk [vmem:[#allocation8 + $0x10] sm:$0xff] %vm135, %v1786
    %1791 = vst.msk [vmem:[#allocation8 + $0x18] sm:$0xff] %vm135, %v1787
    // Predicated region
    $region66: #{tpu_custom_call.1} parent=1 // pred_check
      _
    $region67: #{tpu_custom_call.1} parent=1 // pred_check_branch
      %1793 = sbr.rel (0) target = $region69
    $region68: #{tpu_custom_call.1} parent=1 // pred_region
      %s1795 = ssub.s32 512, 512
      %1796 = vsyncadd [#allocation4], %s1795
      %s1797 = sshll.u32 [#allocation8], 4
      %s1798 = int_to_ptr.vmem [resolvable:$true] %s1797
      %1803 = dma.vmem_to_hbm [thread:$0]  %s1798, 512, %s13, [#allocation4], 128, 128, 8
    $region69: #{tpu_custom_call.1} parent=1 // pred_fallthru
      _
    // Predicated region
    $region70: #{tpu_custom_call.1} parent=1 // pred_check
      _
    $region71: #{tpu_custom_call.1} parent=1 // pred_check_branch
      %1805 = sbr.rel (0) target = $region73
    $region72: #{tpu_custom_call.1} parent=1 // pred_region
      %1806 = dma.done [#allocation4], 512
    $region73: #{tpu_custom_call.1} parent=1 // pred_fallthru
      _
    %1807 = vsyncpa [#allocation3], 1
    %1808 = vsyncpa [#allocation6], 1
    %1809 = vsyncpa [#allocation4], 1

</llo_original>
